<compile_context>
chip_gen: v7x
topology: tpu7x:2x2x1
jax: 0.10.0
libtpu: 0.0.40
codegen_flags: <defaults>
</compile_context>

<pallas_src>
import jax
import jax.numpy as jnp
from jax import lax
from jax.experimental import pallas as pl
from jax.experimental.pallas import tpu as pltpu


def lstm_kernel(x_ref, w_ih_ref, w_hh_ref, b_ref, w_out_ref, b_out_ref,
                y_ref, gx_ref, hs_ref):
    T, B, D = x_ref.shape
    H = w_hh_ref.shape[0]          # w_hh_ref is (H, 4H) (pre-transposed)

    # ---- Phase 1: input projection for all timesteps in one MXU matmul ------
    x_all = x_ref[...].reshape(T * B, D)                                # (T*B, D)
    gx = (jnp.dot(x_all, w_ih_ref[...], preferred_element_type=jnp.float32)
          + b_ref[...])                                                 # (T*B, 4H)
    gx_ref[...] = gx.reshape(T, B, 4 * H)

    # loop-invariant recurrent weight, loaded once (fits comfortably in vregs)
    w_hh = w_hh_ref[...]                                                # (H, 4H)

    # ---- Phase 2: serial recurrence (only the h-dependent work) -------------
    def step(t, carry):
        h, c = carry
        gates = gx_ref[t] + jnp.dot(h, w_hh,
                                    preferred_element_type=jnp.float32)  # (B, 4H)

        # Full-vreg activations: one sigmoid + one tanh EUP push per step,
        # then slice the activated values (PyTorch gate order: i, f, g, o).
        sg = jax.nn.sigmoid(gates)
        tg = jnp.tanh(gates)
        i_g = sg[:, 0 * H:1 * H]
        f_g = sg[:, 1 * H:2 * H]
        g_g = tg[:, 2 * H:3 * H]
        o_g = sg[:, 3 * H:4 * H]

        c_new = f_g * c + i_g * g_g
        h_new = o_g * jnp.tanh(c_new)

        hs_ref[t] = h_new                      # cheap leading-axis store
        return h_new, c_new

    h0 = jnp.zeros((B, H), jnp.float32)
    c0 = jnp.zeros((B, H), jnp.float32)
    lax.fori_loop(0, T, step, (h0, c0), unroll=True)   # T is static (=8)

    # ---- Phase 3: Linear(H, 1) over all timesteps + single lane-dense store --
    hs = hs_ref[...]                                                    # (T, B, H)
    y_tb = jnp.sum(hs * w_out_ref[...], axis=-1) + b_out_ref[...]       # (T, B)
    y_ref[...] = jnp.transpose(y_tb).astype(y_ref.dtype)                # (B, T)


def lstm_forward(x, w_ih, w_hh, b_ih, b_hh, w_out, b_out):
    """x: (B, T, D); weights in PyTorch layout:
       w_ih (4H, D), w_hh (4H, H), b_ih/b_hh (4H,), w_out (1, H), b_out (1,)."""
    B, T, D = x.shape
    H = w_hh.shape[1]

    # plain-JAX layout plumbing: transpose x, pre-transpose weights, fold biases
    x_tbd = jnp.transpose(jnp.asarray(x, jnp.float32), (1, 0, 2))   # (T, B, D)
    w_ih_t = jnp.asarray(w_ih, jnp.float32).T                        # (D, 4H)
    w_hh_t = jnp.asarray(w_hh, jnp.float32).T                        # (H, 4H)
    b = (jnp.asarray(b_ih, jnp.float32)
         + jnp.asarray(b_hh, jnp.float32))[None, :]                  # (1, 4H)
    w_out2 = jnp.asarray(w_out, jnp.float32)                         # (1, H)
    b_out2 = jnp.asarray(b_out, jnp.float32)[None, :]                # (1, 1)

    y_bt = pl.pallas_call(
        lstm_kernel,
        out_shape=jax.ShapeDtypeStruct((B, T), jnp.float32),
        in_specs=[pl.BlockSpec(memory_space=pltpu.MemorySpace.VMEM)] * 6,
        out_specs=pl.BlockSpec(memory_space=pltpu.MemorySpace.VMEM),
        scratch_shapes=[
            pltpu.VMEM((T, B, 4 * H), jnp.float32),   # gates_x (input projection)
            pltpu.VMEM((T, B, H), jnp.float32),       # hidden states h_1..h_T
        ],
    )(x_tbd, w_ih_t, w_hh_t, b, w_out2, b_out2)

    return y_bt[..., None]                                           # (B, T, 1)


def lstm_reference(x, w_ih, w_hh, b_ih, b_hh, w_out, b_out):
    """Pure-JAX reference mirroring torch.nn.LSTM + Linear."""
    B, T, D = x.shape
    H = w_hh.shape[1]

    def step(carry, x_t):
        h, c = carry
        gates = x_t @ w_ih.T + h @ w_hh.T + b_ih + b_hh
        i_g = jax.nn.sigmoid(gates[:, 0 * H:1 * H])
        f_g = jax.nn.sigmoid(gates[:, 1 * H:2 * H])
        g_g = jnp.tanh(gates[:, 2 * H:3 * H])
        o_g = jax.nn.sigmoid(gates[:, 3 * H:4 * H])
        c_new = f_g * c + i_g * g_g
        h_new = o_g * jnp.tanh(c_new)
        return (h_new, c_new), h_new

    h0 = jnp.zeros((B, H), jnp.float32)
    c0 = jnp.zeros((B, H), jnp.float32)
    _, hs = lax.scan(step, (h0, c0), jnp.transpose(x, (1, 0, 2)))
    hs = jnp.transpose(hs, (1, 0, 2))                   # (B, T, H)
    return hs @ w_out.T + b_out                         # (B, T, 1)


if __name__ == "__main__":
    # Small shapes consistent with the module: input_size = hidden_size = 32
    B, T, D = 2, 8, 32
    H = D

    key = jax.random.PRNGKey(0)
    k = 1.0 / jnp.sqrt(jnp.float32(H))
    ks = jax.random.split(key, 7)
    w_ih = jax.random.uniform(ks[0], (4 * H, D), jnp.float32, -k, k)
    w_hh = jax.random.uniform(ks[1], (4 * H, H), jnp.float32, -k, k)
    b_ih = jax.random.uniform(ks[2], (4 * H,), jnp.float32, -k, k)
    b_hh = jax.random.uniform(ks[3], (4 * H,), jnp.float32, -k, k)
    w_out = jax.random.uniform(ks[4], (1, H), jnp.float32, -k, k)
    b_out = jax.random.uniform(ks[5], (1,), jnp.float32, -k, k)
    x = jax.random.normal(ks[6], (B, T, D), jnp.float32)

    y = lstm_forward(x, w_ih, w_hh, b_ih, b_hh, w_out, b_out)
    y = jax.block_until_ready(y)

    y_ref = lstm_reference(x, w_ih, w_hh, b_ih, b_hh, w_out, b_out)
    assert y.shape == (B, T, 1), y.shape
    assert jnp.allclose(y, y_ref, atol=1e-5, rtol=1e-5), (
        float(jnp.max(jnp.abs(y - y_ref))))

    print("KERNEL_OK")
</pallas_src>

<mosaic_0001>
module attributes {stable_mosaic.version = 11 : i64} {
  func.func @lstm_kernel(%arg0: memref<8x2x32xf32, #tpu.memory_space<vmem>>, %arg1: memref<32x128xf32, #tpu.memory_space<vmem>>, %arg2: memref<32x128xf32, #tpu.memory_space<vmem>>, %arg3: memref<1x128xf32, #tpu.memory_space<vmem>>, %arg4: memref<1x32xf32, #tpu.memory_space<vmem>>, %arg5: memref<1x1xf32, #tpu.memory_space<vmem>>, %arg6: memref<2x8xf32, #tpu.memory_space<vmem>>, %arg7: memref<8x2x128xf32, #tpu.memory_space<vmem>>, %arg8: memref<8x2x32xf32, #tpu.memory_space<vmem>>) attributes {dimension_semantics = [], scalar_prefetch = 0 : i64, scratch_operands = 2 : i64, tpu.core_type = #tpu.core_type<tc>} {
    %c0 = arith.constant 0 : index
    %c0_0 = arith.constant 0 : index
    %c0_1 = arith.constant 0 : index
    %0 = vector.load %arg0[%c0, %c0_0, %c0_1] : memref<8x2x32xf32, #tpu.memory_space<vmem>>, vector<8x2x32xf32>
    %1 = vector.shape_cast %0 : vector<8x2x32xf32> to vector<16x32xf32>
    %c0_2 = arith.constant 0 : index
    %c0_3 = arith.constant 0 : index
    %2 = vector.load %arg1[%c0_2, %c0_3] : memref<32x128xf32, #tpu.memory_space<vmem>>, vector<32x128xf32>
    %cst = arith.constant dense<0.000000e+00> : vector<16x128xf32>
    %3 = tpu.matmul %1, %2, %cst {dimension_numbers = #tpu.dot_dimension_numbers<[1], [0], [0], [1], [0, 0, 1, 1], [], []>} : vector<16x32xf32>, vector<32x128xf32>, vector<16x128xf32> -> vector<16x128xf32>
    %c0_4 = arith.constant 0 : index
    %c0_5 = arith.constant 0 : index
    %4 = vector.load %arg3[%c0_4, %c0_5] : memref<1x128xf32, #tpu.memory_space<vmem>>, vector<1x128xf32>
    %5 = vector.broadcast %4 : vector<1x128xf32> to vector<16x128xf32>
    %6 = arith.addf %3, %5 : vector<16x128xf32>
    %7 = vector.shape_cast %6 : vector<16x128xf32> to vector<8x2x128xf32>
    %c0_6 = arith.constant 0 : index
    %c0_7 = arith.constant 0 : index
    %c0_8 = arith.constant 0 : index
    %8 = vector.load %arg7[%c0_6, %c0_7, %c0_8] : memref<8x2x128xf32, #tpu.memory_space<vmem>>, vector<8x2x128xf32>
    tpu.vector_store %arg7[%c0_6, %c0_7, %c0_8], %7 {strides = array<i32>} : memref<8x2x128xf32, #tpu.memory_space<vmem>>, vector<8x2x128xf32>,
    %c0_9 = arith.constant 0 : index
    %c0_10 = arith.constant 0 : index
    %9 = vector.load %arg2[%c0_9, %c0_10] : memref<32x128xf32, #tpu.memory_space<vmem>>, vector<32x128xf32>
    %cst_11 = arith.constant 0.000000e+00 : f32
    %10 = vector.broadcast %cst_11 : f32 to vector<2x32xf32>
    %cst_12 = arith.constant 0.000000e+00 : f32
    %11 = vector.broadcast %cst_12 : f32 to vector<2x32xf32>
    %c0_i32 = arith.constant 0 : i32
    %12 = arith.index_cast %c0_i32 : i32 to index
    %c0_13 = arith.constant 0 : index
    %c0_14 = arith.constant 0 : index
    %13 = vector.load %arg7[%12, %c0_13, %c0_14] : memref<8x2x128xf32, #tpu.memory_space<vmem>>, vector<1x2x128xf32>
    %14 = vector.shape_cast %13 : vector<1x2x128xf32> to vector<2x128xf32>
    %cst_15 = arith.constant dense<0.000000e+00> : vector<2x128xf32>
    %15 = tpu.matmul %10, %9, %cst_15 {dimension_numbers = #tpu.dot_dimension_numbers<[1], [0], [0], [1], [0, 0, 1, 1], [], []>} : vector<2x32xf32>, vector<32x128xf32>, vector<2x128xf32> -> vector<2x128xf32>
    %16 = arith.addf %14, %15 : vector<2x128xf32>
    %17 = arith.negf %16 : vector<2x128xf32>
    %18 = math.exp %17 : vector<2x128xf32>
    %cst_16 = arith.constant 1.000000e+00 : f32
    %19 = vector.broadcast %cst_16 : f32 to vector<2x128xf32>
    %20 = arith.addf %19, %18 : vector<2x128xf32>
    %21 = arith.divf %19, %20 : vector<2x128xf32>
    %22 = math.tanh %16 : vector<2x128xf32>
    %23 = vector.extract_strided_slice %21 {offsets = [0, 0], sizes = [2, 32], strides = [1, 1]} : vector<2x128xf32> to vector<2x32xf32>
    %24 = vector.extract_strided_slice %21 {offsets = [0, 32], sizes = [2, 32], strides = [1, 1]} : vector<2x128xf32> to vector<2x32xf32>
    %25 = vector.extract_strided_slice %22 {offsets = [0, 64], sizes = [2, 32], strides = [1, 1]} : vector<2x128xf32> to vector<2x32xf32>
    %26 = vector.extract_strided_slice %21 {offsets = [0, 96], sizes = [2, 32], strides = [1, 1]} : vector<2x128xf32> to vector<2x32xf32>
    %27 = arith.mulf %24, %11 : vector<2x32xf32>
    %28 = arith.mulf %23, %25 : vector<2x32xf32>
    %29 = arith.addf %27, %28 : vector<2x32xf32>
    %30 = math.tanh %29 : vector<2x32xf32>
    %31 = arith.mulf %26, %30 : vector<2x32xf32>
    %32 = arith.index_cast %c0_i32 : i32 to index
    %c0_17 = arith.constant 0 : index
    %c0_18 = arith.constant 0 : index
    %33 = vector.load %arg8[%32, %c0_17, %c0_18] : memref<8x2x32xf32, #tpu.memory_space<vmem>>, vector<1x2x32xf32>
    %34 = vector.shape_cast %33 : vector<1x2x32xf32> to vector<2x32xf32>
    %35 = vector.shape_cast %31 : vector<2x32xf32> to vector<1x2x32xf32>
    tpu.vector_store %arg8[%32, %c0_17, %c0_18], %35 {strides = array<i32>} : memref<8x2x32xf32, #tpu.memory_space<vmem>>, vector<1x2x32xf32>,
    %c1_i32 = arith.constant 1 : i32
    %36 = arith.index_cast %c1_i32 : i32 to index
    %c0_19 = arith.constant 0 : index
    %c0_20 = arith.constant 0 : index
    %37 = vector.load %arg7[%36, %c0_19, %c0_20] : memref<8x2x128xf32, #tpu.memory_space<vmem>>, vector<1x2x128xf32>
    %38 = vector.shape_cast %37 : vector<1x2x128xf32> to vector<2x128xf32>
    %cst_21 = arith.constant dense<0.000000e+00> : vector<2x128xf32>
    %39 = tpu.matmul %31, %9, %cst_21 {dimension_numbers = #tpu.dot_dimension_numbers<[1], [0], [0], [1], [0, 0, 1, 1], [], []>} : vector<2x32xf32>, vector<32x128xf32>, vector<2x128xf32> -> vector<2x128xf32>
    %40 = arith.addf %38, %39 : vector<2x128xf32>
    %41 = arith.negf %40 : vector<2x128xf32>
    %42 = math.exp %41 : vector<2x128xf32>
    %cst_22 = arith.constant 1.000000e+00 : f32
    %43 = vector.broadcast %cst_22 : f32 to vector<2x128xf32>
    %44 = arith.addf %43, %42 : vector<2x128xf32>
    %45 = arith.divf %43, %44 : vector<2x128xf32>
    %46 = math.tanh %40 : vector<2x128xf32>
    %47 = vector.extract_strided_slice %45 {offsets = [0, 0], sizes = [2, 32], strides = [1, 1]} : vector<2x128xf32> to vector<2x32xf32>
    %48 = vector.extract_strided_slice %45 {offsets = [0, 32], sizes = [2, 32], strides = [1, 1]} : vector<2x128xf32> to vector<2x32xf32>
    %49 = vector.extract_strided_slice %46 {offsets = [0, 64], sizes = [2, 32], strides = [1, 1]} : vector<2x128xf32> to vector<2x32xf32>
    %50 = vector.extract_strided_slice %45 {offsets = [0, 96], sizes = [2, 32], strides = [1, 1]} : vector<2x128xf32> to vector<2x32xf32>
    %51 = arith.mulf %48, %29 : vector<2x32xf32>
    %52 = arith.mulf %47, %49 : vector<2x32xf32>
    %53 = arith.addf %51, %52 : vector<2x32xf32>
    %54 = math.tanh %53 : vector<2x32xf32>
    %55 = arith.mulf %50, %54 : vector<2x32xf32>
    %56 = arith.index_cast %c1_i32 : i32 to index
    %c0_23 = arith.constant 0 : index
    %c0_24 = arith.constant 0 : index
    %57 = vector.load %arg8[%56, %c0_23, %c0_24] : memref<8x2x32xf32, #tpu.memory_space<vmem>>, vector<1x2x32xf32>
    %58 = vector.shape_cast %57 : vector<1x2x32xf32> to vector<2x32xf32>
    %59 = vector.shape_cast %55 : vector<2x32xf32> to vector<1x2x32xf32>
    tpu.vector_store %arg8[%56, %c0_23, %c0_24], %59 {strides = array<i32>} : memref<8x2x32xf32, #tpu.memory_space<vmem>>, vector<1x2x32xf32>,
    %c2_i32 = arith.constant 2 : i32
    %60 = arith.index_cast %c2_i32 : i32 to index
    %c0_25 = arith.constant 0 : index
    %c0_26 = arith.constant 0 : index
    %61 = vector.load %arg7[%60, %c0_25, %c0_26] : memref<8x2x128xf32, #tpu.memory_space<vmem>>, vector<1x2x128xf32>
    %62 = vector.shape_cast %61 : vector<1x2x128xf32> to vector<2x128xf32>
    %cst_27 = arith.constant dense<0.000000e+00> : vector<2x128xf32>
    %63 = tpu.matmul %55, %9, %cst_27 {dimension_numbers = #tpu.dot_dimension_numbers<[1], [0], [0], [1], [0, 0, 1, 1], [], []>} : vector<2x32xf32>, vector<32x128xf32>, vector<2x128xf32> -> vector<2x128xf32>
    %64 = arith.addf %62, %63 : vector<2x128xf32>
    %65 = arith.negf %64 : vector<2x128xf32>
    %66 = math.exp %65 : vector<2x128xf32>
    %cst_28 = arith.constant 1.000000e+00 : f32
    %67 = vector.broadcast %cst_28 : f32 to vector<2x128xf32>
    %68 = arith.addf %67, %66 : vector<2x128xf32>
    %69 = arith.divf %67, %68 : vector<2x128xf32>
    %70 = math.tanh %64 : vector<2x128xf32>
    %71 = vector.extract_strided_slice %69 {offsets = [0, 0], sizes = [2, 32], strides = [1, 1]} : vector<2x128xf32> to vector<2x32xf32>
    %72 = vector.extract_strided_slice %69 {offsets = [0, 32], sizes = [2, 32], strides = [1, 1]} : vector<2x128xf32> to vector<2x32xf32>
    %73 = vector.extract_strided_slice %70 {offsets = [0, 64], sizes = [2, 32], strides = [1, 1]} : vector<2x128xf32> to vector<2x32xf32>
    %74 = vector.extract_strided_slice %69 {offsets = [0, 96], sizes = [2, 32], strides = [1, 1]} : vector<2x128xf32> to vector<2x32xf32>
    %75 = arith.mulf %72, %53 : vector<2x32xf32>
    %76 = arith.mulf %71, %73 : vector<2x32xf32>
    %77 = arith.addf %75, %76 : vector<2x32xf32>
    %78 = math.tanh %77 : vector<2x32xf32>
    %79 = arith.mulf %74, %78 : vector<2x32xf32>
    %80 = arith.index_cast %c2_i32 : i32 to index
    %c0_29 = arith.constant 0 : index
    %c0_30 = arith.constant 0 : index
    %81 = vector.load %arg8[%80, %c0_29, %c0_30] : memref<8x2x32xf32, #tpu.memory_space<vmem>>, vector<1x2x32xf32>
    %82 = vector.shape_cast %81 : vector<1x2x32xf32> to vector<2x32xf32>
    %83 = vector.shape_cast %79 : vector<2x32xf32> to vector<1x2x32xf32>
    tpu.vector_store %arg8[%80, %c0_29, %c0_30], %83 {strides = array<i32>} : memref<8x2x32xf32, #tpu.memory_space<vmem>>, vector<1x2x32xf32>,
    %c3_i32 = arith.constant 3 : i32
    %84 = arith.index_cast %c3_i32 : i32 to index
    %c0_31 = arith.constant 0 : index
    %c0_32 = arith.constant 0 : index
    %85 = vector.load %arg7[%84, %c0_31, %c0_32] : memref<8x2x128xf32, #tpu.memory_space<vmem>>, vector<1x2x128xf32>
    %86 = vector.shape_cast %85 : vector<1x2x128xf32> to vector<2x128xf32>
    %cst_33 = arith.constant dense<0.000000e+00> : vector<2x128xf32>
    %87 = tpu.matmul %79, %9, %cst_33 {dimension_numbers = #tpu.dot_dimension_numbers<[1], [0], [0], [1], [0, 0, 1, 1], [], []>} : vector<2x32xf32>, vector<32x128xf32>, vector<2x128xf32> -> vector<2x128xf32>
    %88 = arith.addf %86, %87 : vector<2x128xf32>
    %89 = arith.negf %88 : vector<2x128xf32>
    %90 = math.exp %89 : vector<2x128xf32>
    %cst_34 = arith.constant 1.000000e+00 : f32
    %91 = vector.broadcast %cst_34 : f32 to vector<2x128xf32>
    %92 = arith.addf %91, %90 : vector<2x128xf32>
    %93 = arith.divf %91, %92 : vector<2x128xf32>
    %94 = math.tanh %88 : vector<2x128xf32>
    %95 = vector.extract_strided_slice %93 {offsets = [0, 0], sizes = [2, 32], strides = [1, 1]} : vector<2x128xf32> to vector<2x32xf32>
    %96 = vector.extract_strided_slice %93 {offsets = [0, 32], sizes = [2, 32], strides = [1, 1]} : vector<2x128xf32> to vector<2x32xf32>
    %97 = vector.extract_strided_slice %94 {offsets = [0, 64], sizes = [2, 32], strides = [1, 1]} : vector<2x128xf32> to vector<2x32xf32>
    %98 = vector.extract_strided_slice %93 {offsets = [0, 96], sizes = [2, 32], strides = [1, 1]} : vector<2x128xf32> to vector<2x32xf32>
    %99 = arith.mulf %96, %77 : vector<2x32xf32>
    %100 = arith.mulf %95, %97 : vector<2x32xf32>
    %101 = arith.addf %99, %100 : vector<2x32xf32>
    %102 = math.tanh %101 : vector<2x32xf32>
    %103 = arith.mulf %98, %102 : vector<2x32xf32>
    %104 = arith.index_cast %c3_i32 : i32 to index
    %c0_35 = arith.constant 0 : index
    %c0_36 = arith.constant 0 : index
    %105 = vector.load %arg8[%104, %c0_35, %c0_36] : memref<8x2x32xf32, #tpu.memory_space<vmem>>, vector<1x2x32xf32>
    %106 = vector.shape_cast %105 : vector<1x2x32xf32> to vector<2x32xf32>
    %107 = vector.shape_cast %103 : vector<2x32xf32> to vector<1x2x32xf32>
    tpu.vector_store %arg8[%104, %c0_35, %c0_36], %107 {strides = array<i32>} : memref<8x2x32xf32, #tpu.memory_space<vmem>>, vector<1x2x32xf32>,
    %c4_i32 = arith.constant 4 : i32
    %108 = arith.index_cast %c4_i32 : i32 to index
    %c0_37 = arith.constant 0 : index
    %c0_38 = arith.constant 0 : index
    %109 = vector.load %arg7[%108, %c0_37, %c0_38] : memref<8x2x128xf32, #tpu.memory_space<vmem>>, vector<1x2x128xf32>
    %110 = vector.shape_cast %109 : vector<1x2x128xf32> to vector<2x128xf32>
    %cst_39 = arith.constant dense<0.000000e+00> : vector<2x128xf32>
    %111 = tpu.matmul %103, %9, %cst_39 {dimension_numbers = #tpu.dot_dimension_numbers<[1], [0], [0], [1], [0, 0, 1, 1], [], []>} : vector<2x32xf32>, vector<32x128xf32>, vector<2x128xf32> -> vector<2x128xf32>
    %112 = arith.addf %110, %111 : vector<2x128xf32>
    %113 = arith.negf %112 : vector<2x128xf32>
    %114 = math.exp %113 : vector<2x128xf32>
    %cst_40 = arith.constant 1.000000e+00 : f32
    %115 = vector.broadcast %cst_40 : f32 to vector<2x128xf32>
    %116 = arith.addf %115, %114 : vector<2x128xf32>
    %117 = arith.divf %115, %116 : vector<2x128xf32>
    %118 = math.tanh %112 : vector<2x128xf32>
    %119 = vector.extract_strided_slice %117 {offsets = [0, 0], sizes = [2, 32], strides = [1, 1]} : vector<2x128xf32> to vector<2x32xf32>
    %120 = vector.extract_strided_slice %117 {offsets = [0, 32], sizes = [2, 32], strides = [1, 1]} : vector<2x128xf32> to vector<2x32xf32>
    %121 = vector.extract_strided_slice %118 {offsets = [0, 64], sizes = [2, 32], strides = [1, 1]} : vector<2x128xf32> to vector<2x32xf32>
    %122 = vector.extract_strided_slice %117 {offsets = [0, 96], sizes = [2, 32], strides = [1, 1]} : vector<2x128xf32> to vector<2x32xf32>
    %123 = arith.mulf %120, %101 : vector<2x32xf32>
    %124 = arith.mulf %119, %121 : vector<2x32xf32>
    %125 = arith.addf %123, %124 : vector<2x32xf32>
    %126 = math.tanh %125 : vector<2x32xf32>
    %127 = arith.mulf %122, %126 : vector<2x32xf32>
    %128 = arith.index_cast %c4_i32 : i32 to index
    %c0_41 = arith.constant 0 : index
    %c0_42 = arith.constant 0 : index
    %129 = vector.load %arg8[%128, %c0_41, %c0_42] : memref<8x2x32xf32, #tpu.memory_space<vmem>>, vector<1x2x32xf32>
    %130 = vector.shape_cast %129 : vector<1x2x32xf32> to vector<2x32xf32>
    %131 = vector.shape_cast %127 : vector<2x32xf32> to vector<1x2x32xf32>
    tpu.vector_store %arg8[%128, %c0_41, %c0_42], %131 {strides = array<i32>} : memref<8x2x32xf32, #tpu.memory_space<vmem>>, vector<1x2x32xf32>,
    %c5_i32 = arith.constant 5 : i32
    %132 = arith.index_cast %c5_i32 : i32 to index
    %c0_43 = arith.constant 0 : index
    %c0_44 = arith.constant 0 : index
    %133 = vector.load %arg7[%132, %c0_43, %c0_44] : memref<8x2x128xf32, #tpu.memory_space<vmem>>, vector<1x2x128xf32>
    %134 = vector.shape_cast %133 : vector<1x2x128xf32> to vector<2x128xf32>
    %cst_45 = arith.constant dense<0.000000e+00> : vector<2x128xf32>
    %135 = tpu.matmul %127, %9, %cst_45 {dimension_numbers = #tpu.dot_dimension_numbers<[1], [0], [0], [1], [0, 0, 1, 1], [], []>} : vector<2x32xf32>, vector<32x128xf32>, vector<2x128xf32> -> vector<2x128xf32>
    %136 = arith.addf %134, %135 : vector<2x128xf32>
    %137 = arith.negf %136 : vector<2x128xf32>
    %138 = math.exp %137 : vector<2x128xf32>
    %cst_46 = arith.constant 1.000000e+00 : f32
    %139 = vector.broadcast %cst_46 : f32 to vector<2x128xf32>
    %140 = arith.addf %139, %138 : vector<2x128xf32>
    %141 = arith.divf %139, %140 : vector<2x128xf32>
    %142 = math.tanh %136 : vector<2x128xf32>
    %143 = vector.extract_strided_slice %141 {offsets = [0, 0], sizes = [2, 32], strides = [1, 1]} : vector<2x128xf32> to vector<2x32xf32>
    %144 = vector.extract_strided_slice %141 {offsets = [0, 32], sizes = [2, 32], strides = [1, 1]} : vector<2x128xf32> to vector<2x32xf32>
    %145 = vector.extract_strided_slice %142 {offsets = [0, 64], sizes = [2, 32], strides = [1, 1]} : vector<2x128xf32> to vector<2x32xf32>
    %146 = vector.extract_strided_slice %141 {offsets = [0, 96], sizes = [2, 32], strides = [1, 1]} : vector<2x128xf32> to vector<2x32xf32>
    %147 = arith.mulf %144, %125 : vector<2x32xf32>
    %148 = arith.mulf %143, %145 : vector<2x32xf32>
    %149 = arith.addf %147, %148 : vector<2x32xf32>
    %150 = math.tanh %149 : vector<2x32xf32>
    %151 = arith.mulf %146, %150 : vector<2x32xf32>
    %152 = arith.index_cast %c5_i32 : i32 to index
    %c0_47 = arith.constant 0 : index
    %c0_48 = arith.constant 0 : index
    %153 = vector.load %arg8[%152, %c0_47, %c0_48] : memref<8x2x32xf32, #tpu.memory_space<vmem>>, vector<1x2x32xf32>
    %154 = vector.shape_cast %153 : vector<1x2x32xf32> to vector<2x32xf32>
    %155 = vector.shape_cast %151 : vector<2x32xf32> to vector<1x2x32xf32>
    tpu.vector_store %arg8[%152, %c0_47, %c0_48], %155 {strides = array<i32>} : memref<8x2x32xf32, #tpu.memory_space<vmem>>, vector<1x2x32xf32>,
    %c6_i32 = arith.constant 6 : i32
    %156 = arith.index_cast %c6_i32 : i32 to index
    %c0_49 = arith.constant 0 : index
    %c0_50 = arith.constant 0 : index
    %157 = vector.load %arg7[%156, %c0_49, %c0_50] : memref<8x2x128xf32, #tpu.memory_space<vmem>>, vector<1x2x128xf32>
    %158 = vector.shape_cast %157 : vector<1x2x128xf32> to vector<2x128xf32>
    %cst_51 = arith.constant dense<0.000000e+00> : vector<2x128xf32>
    %159 = tpu.matmul %151, %9, %cst_51 {dimension_numbers = #tpu.dot_dimension_numbers<[1], [0], [0], [1], [0, 0, 1, 1], [], []>} : vector<2x32xf32>, vector<32x128xf32>, vector<2x128xf32> -> vector<2x128xf32>
    %160 = arith.addf %158, %159 : vector<2x128xf32>
    %161 = arith.negf %160 : vector<2x128xf32>
    %162 = math.exp %161 : vector<2x128xf32>
    %cst_52 = arith.constant 1.000000e+00 : f32
    %163 = vector.broadcast %cst_52 : f32 to vector<2x128xf32>
    %164 = arith.addf %163, %162 : vector<2x128xf32>
    %165 = arith.divf %163, %164 : vector<2x128xf32>
    %166 = math.tanh %160 : vector<2x128xf32>
    %167 = vector.extract_strided_slice %165 {offsets = [0, 0], sizes = [2, 32], strides = [1, 1]} : vector<2x128xf32> to vector<2x32xf32>
    %168 = vector.extract_strided_slice %165 {offsets = [0, 32], sizes = [2, 32], strides = [1, 1]} : vector<2x128xf32> to vector<2x32xf32>
    %169 = vector.extract_strided_slice %166 {offsets = [0, 64], sizes = [2, 32], strides = [1, 1]} : vector<2x128xf32> to vector<2x32xf32>
    %170 = vector.extract_strided_slice %165 {offsets = [0, 96], sizes = [2, 32], strides = [1, 1]} : vector<2x128xf32> to vector<2x32xf32>
    %171 = arith.mulf %168, %149 : vector<2x32xf32>
    %172 = arith.mulf %167, %169 : vector<2x32xf32>
    %173 = arith.addf %171, %172 : vector<2x32xf32>
    %174 = math.tanh %173 : vector<2x32xf32>
    %175 = arith.mulf %170, %174 : vector<2x32xf32>
    %176 = arith.index_cast %c6_i32 : i32 to index
    %c0_53 = arith.constant 0 : index
    %c0_54 = arith.constant 0 : index
    %177 = vector.load %arg8[%176, %c0_53, %c0_54] : memref<8x2x32xf32, #tpu.memory_space<vmem>>, vector<1x2x32xf32>
    %178 = vector.shape_cast %177 : vector<1x2x32xf32> to vector<2x32xf32>
    %179 = vector.shape_cast %175 : vector<2x32xf32> to vector<1x2x32xf32>
    tpu.vector_store %arg8[%176, %c0_53, %c0_54], %179 {strides = array<i32>} : memref<8x2x32xf32, #tpu.memory_space<vmem>>, vector<1x2x32xf32>,
    %c7_i32 = arith.constant 7 : i32
    %180 = arith.index_cast %c7_i32 : i32 to index
    %c0_55 = arith.constant 0 : index
    %c0_56 = arith.constant 0 : index
    %181 = vector.load %arg7[%180, %c0_55, %c0_56] : memref<8x2x128xf32, #tpu.memory_space<vmem>>, vector<1x2x128xf32>
    %182 = vector.shape_cast %181 : vector<1x2x128xf32> to vector<2x128xf32>
    %cst_57 = arith.constant dense<0.000000e+00> : vector<2x128xf32>
    %183 = tpu.matmul %175, %9, %cst_57 {dimension_numbers = #tpu.dot_dimension_numbers<[1], [0], [0], [1], [0, 0, 1, 1], [], []>} : vector<2x32xf32>, vector<32x128xf32>, vector<2x128xf32> -> vector<2x128xf32>
    %184 = arith.addf %182, %183 : vector<2x128xf32>
    %185 = arith.negf %184 : vector<2x128xf32>
    %186 = math.exp %185 : vector<2x128xf32>
    %cst_58 = arith.constant 1.000000e+00 : f32
    %187 = vector.broadcast %cst_58 : f32 to vector<2x128xf32>
    %188 = arith.addf %187, %186 : vector<2x128xf32>
    %189 = arith.divf %187, %188 : vector<2x128xf32>
    %190 = math.tanh %184 : vector<2x128xf32>
    %191 = vector.extract_strided_slice %189 {offsets = [0, 0], sizes = [2, 32], strides = [1, 1]} : vector<2x128xf32> to vector<2x32xf32>
    %192 = vector.extract_strided_slice %189 {offsets = [0, 32], sizes = [2, 32], strides = [1, 1]} : vector<2x128xf32> to vector<2x32xf32>
    %193 = vector.extract_strided_slice %190 {offsets = [0, 64], sizes = [2, 32], strides = [1, 1]} : vector<2x128xf32> to vector<2x32xf32>
    %194 = vector.extract_strided_slice %189 {offsets = [0, 96], sizes = [2, 32], strides = [1, 1]} : vector<2x128xf32> to vector<2x32xf32>
    %195 = arith.mulf %192, %173 : vector<2x32xf32>
    %196 = arith.mulf %191, %193 : vector<2x32xf32>
    %197 = arith.addf %195, %196 : vector<2x32xf32>
    %198 = math.tanh %197 : vector<2x32xf32>
    %199 = arith.mulf %194, %198 : vector<2x32xf32>
    %200 = arith.index_cast %c7_i32 : i32 to index
    %c0_59 = arith.constant 0 : index
    %c0_60 = arith.constant 0 : index
    %201 = vector.load %arg8[%200, %c0_59, %c0_60] : memref<8x2x32xf32, #tpu.memory_space<vmem>>, vector<1x2x32xf32>
    %202 = vector.shape_cast %201 : vector<1x2x32xf32> to vector<2x32xf32>
    %203 = vector.shape_cast %199 : vector<2x32xf32> to vector<1x2x32xf32>
    tpu.vector_store %arg8[%200, %c0_59, %c0_60], %203 {strides = array<i32>} : memref<8x2x32xf32, #tpu.memory_space<vmem>>, vector<1x2x32xf32>,
    %c8_i32 = arith.constant 8 : i32
    %c0_61 = arith.constant 0 : index
    %c0_62 = arith.constant 0 : index
    %c0_63 = arith.constant 0 : index
    %204 = vector.load %arg8[%c0_61, %c0_62, %c0_63] : memref<8x2x32xf32, #tpu.memory_space<vmem>>, vector<8x2x32xf32>
    %c0_64 = arith.constant 0 : index
    %c0_65 = arith.constant 0 : index
    %205 = vector.load %arg4[%c0_64, %c0_65] : memref<1x32xf32, #tpu.memory_space<vmem>>, vector<1x32xf32>
    %206 = vector.shape_cast %205 : vector<1x32xf32> to vector<1x1x32xf32>
    %207 = vector.broadcast %206 : vector<1x1x32xf32> to vector<8x2x32xf32>
    %208 = arith.mulf %204, %207 : vector<8x2x32xf32>
    %cst_66 = arith.constant dense<0.000000e+00> : vector<8x2xf32>
    %209 = vector.multi_reduction <add>, %208, %cst_66 [2] : vector<8x2x32xf32> to vector<8x2xf32>
    %c0_67 = arith.constant 0 : index
    %c0_68 = arith.constant 0 : index
    %210 = vector.load %arg5[%c0_67, %c0_68] : memref<1x1xf32, #tpu.memory_space<vmem>>, vector<1x1xf32>
    %211 = vector.broadcast %210 : vector<1x1xf32> to vector<8x2xf32>
    %212 = arith.addf %209, %211 : vector<8x2xf32>
    %213 = tpu.transpose %212, [1, 0] : vector<8x2xf32> -> vector<2x8xf32>
    %c0_69 = arith.constant 0 : index
    %c0_70 = arith.constant 0 : index
    %214 = vector.load %arg6[%c0_69, %c0_70] : memref<2x8xf32, #tpu.memory_space<vmem>>, vector<2x8xf32>
    tpu.vector_store %arg6[%c0_69, %c0_70], %213 {strides = array<i32>} : memref<2x8xf32, #tpu.memory_space<vmem>>, vector<2x8xf32>,
    return
  }
}

</mosaic_0001>

<llo_original>
// kernel: tpu_custom_call.1
$region0: #{tpu_custom_call.1}
  #allocation0 [shape = 'u32[]', space=smem, size = 0x4, offset = 0x4, fixed_abs, tag = 'smem constant byte address 0x4 - core index']
  #allocation1 [shape = 'u32[144,128]{1,0:T(1,128)}', space=vmem, size = 0x12000, scoped, tag = 'internal scratch']
  #allocation2 [shape = 'f32[8,2,128]{2,1,0:T(2,128)}', space=vmem, size = 0x2000, scoped, tag = 'scratch operand']
  #allocation3 [shape = 'f32[8,2,32]{2,1,0:T(2,128)}', space=vmem, size = 0x2000, scoped, tag = 'scratch operand']
  #allocation4 [shape = 'f32[1,1]{1,0:T(1,128)S(1)}', space=vmem, size = 0x200, scoped, tag = 'scoped memory for tpu_custom_call.1']
  %s0 = inlined_call_operand.hbm [shape: f32[8,2,32], index: 0, kind: input, shape index: {}]
  %s1 = inlined_call_operand.hbm [shape: f32[32,128], index: 1, kind: input, shape index: {}]
  %s2 = inlined_call_operand.hbm [shape: f32[32,128], index: 2, kind: input, shape index: {}]
  %s3 = inlined_call_operand.vmem [shape: f32[1,128], index: 3, kind: input, shape index: {}]
  %s4 = inlined_call_operand.vmem [shape: f32[1,32], index: 4, kind: input, shape index: {}]
  %s5 = inlined_call_operand.<no memory space> [shape: f32[1,1], index: 5, kind: input, shape index: {}]
  %s6 = inlined_call_operand.hbm [shape: f32[2,8], index: 6, kind: output, shape index: {}]
  %s7 = sld [smem:[#allocation0]]
  $region46: #{tpu_custom_call.1} parent=0
    _
  %s9 = ssub.s32 1, %s7
  %s10 = scalar_select 0, %s9, %s7
  %v11 = vstv %s5
  %12 = vst [vmem:[#allocation4] sm:$0x1] %v11
  $region1: #{tpu_custom_call.1} parent=0
    #allocation5 [shape = 'u8[8192]{0}', space=vmem, size = 0x2000, scoped, tag = 'input window, operand 0, single buffered']
    #allocation6 [shape = 's32[1]{0}', space=sflag, size = 0x4, scoped, tag = 'scoped memory for tpu_custom_call.1']
    #allocation7 [shape = 's32[1]{0}', space=sflag, size = 0x4, scoped, tag = 'scoped memory for tpu_custom_call.1']
    #allocation8 [shape = 'u8[16384]{0}', space=vmem, size = 0x4000, scoped, tag = 'input window, operand 1, single buffered']
    #allocation9 [shape = 's32[1]{0}', space=sflag, size = 0x4, scoped, tag = 'scoped memory for tpu_custom_call.1']
    #allocation10 [shape = 'u8[16384]{0}', space=vmem, size = 0x4000, scoped, tag = 'input window, operand 2, single buffered']
    #allocation11 [shape = 'u8[1024]{0}', space=vmem, size = 0x400, scoped, tag = 'output window, operand 0, single buffered']
    %13 = vsyncpa [#allocation6], 0
    %14 = vsyncpa [#allocation9], 0
    %15 = vsyncpa [#allocation7], 0
    // Predicated region
    $region2: #{tpu_custom_call.1} parent=1 // pred_check
      _
    $region3: #{tpu_custom_call.1} parent=1 // pred_check_branch
      %17 = sbr.rel (0) target = $region5
    $region4: #{tpu_custom_call.1} parent=1 // pred_region
      %s19 = ssub.s32 256, 256
      %20 = vsyncadd [#allocation6], %s19
      %s21 = sshll.u32 [#allocation5], 4
      %s22 = int_to_ptr.vmem [resolvable:$true] %s21
      %27 = dma.hbm_to_vmem [thread:$0]  %s0, 256, %s22, [#allocation6], 32, 32, 2
    $region5: #{tpu_custom_call.1} parent=1 // pred_fallthru
      _
    // Predicated region
    $region6: #{tpu_custom_call.1} parent=1 // pred_check
      _
    $region7: #{tpu_custom_call.1} parent=1 // pred_check_branch
      %29 = sbr.rel (0) target = $region9
    $region8: #{tpu_custom_call.1} parent=1 // pred_region
      %s31 = ssub.s32 512, 512
      %32 = vsyncadd [#allocation9], %s31
      %s33 = sshll.u32 [#allocation8], 4
      %s34 = int_to_ptr.vmem [resolvable:$true] %s33
      %39 = dma.hbm_to_vmem [thread:$0]  %s1, 512, %s34, [#allocation9], 128, 128, 8
    $region9: #{tpu_custom_call.1} parent=1 // pred_fallthru
      _
    // Predicated region
    $region10: #{tpu_custom_call.1} parent=1 // pred_check
      _
    $region11: #{tpu_custom_call.1} parent=1 // pred_check_branch
      %41 = sbr.rel (0) target = $region13
    $region12: #{tpu_custom_call.1} parent=1 // pred_region
      %s43 = ssub.s32 512, 512
      %44 = vsyncadd [#allocation9], %s43
      %s45 = sshll.u32 [#allocation10], 4
      %s46 = int_to_ptr.vmem [resolvable:$true] %s45
      %51 = dma.hbm_to_vmem [thread:$0]  %s2, 512, %s46, [#allocation9], 128, 128, 8
    $region13: #{tpu_custom_call.1} parent=1 // pred_fallthru
      _
    // Predicated region
    $region14: #{tpu_custom_call.1} parent=1 // pred_check
      _
    $region15: #{tpu_custom_call.1} parent=1 // pred_check_branch
      %53 = sbr.rel (0) target = $region17
    $region16: #{tpu_custom_call.1} parent=1 // pred_region
      _
    $region17: #{tpu_custom_call.1} parent=1 // pred_fallthru
      _
    // Predicated region
    $region18: #{tpu_custom_call.1} parent=1 // pred_check
      _
    $region19: #{tpu_custom_call.1} parent=1 // pred_check_branch
      %55 = sbr.rel (0) target = $region21
    $region20: #{tpu_custom_call.1} parent=1 // pred_region
      _
    $region21: #{tpu_custom_call.1} parent=1 // pred_fallthru
      _
    // Predicated region
    $region22: #{tpu_custom_call.1} parent=1 // pred_check
      _
    $region23: #{tpu_custom_call.1} parent=1 // pred_check_branch
      %57 = sbr.rel (0) target = $region25
    $region24: #{tpu_custom_call.1} parent=1 // pred_region
      _
    $region25: #{tpu_custom_call.1} parent=1 // pred_fallthru
      _
    // Predicated region
    $region26: #{tpu_custom_call.1} parent=1 // pred_check
      _
    $region27: #{tpu_custom_call.1} parent=1 // pred_check_branch
      %59 = sbr.rel (0) target = $region29
    $region28: #{tpu_custom_call.1} parent=1 // pred_region
      %60 = dma.done [#allocation6], 256
    $region29: #{tpu_custom_call.1} parent=1 // pred_fallthru
      _
    // Predicated region
    $region30: #{tpu_custom_call.1} parent=1 // pred_check
      _
    $region31: #{tpu_custom_call.1} parent=1 // pred_check_branch
      %62 = sbr.rel (0) target = $region33
    $region32: #{tpu_custom_call.1} parent=1 // pred_region
      %63 = dma.done [#allocation9], 512
    $region33: #{tpu_custom_call.1} parent=1 // pred_fallthru
      _
    // Predicated region
    $region34: #{tpu_custom_call.1} parent=1 // pred_check
      _
    $region35: #{tpu_custom_call.1} parent=1 // pred_check_branch
      %65 = sbr.rel (0) target = $region37
    $region36: #{tpu_custom_call.1} parent=1 // pred_region
      %66 = dma.done [#allocation9], 512
    $region37: #{tpu_custom_call.1} parent=1 // pred_fallthru
      _
    %v67 = vld [vmem:[#allocation5] sm:$0x3]
    %v68 = vld [vmem:[#allocation5 + $0x2] sm:$0x3]
    %v69 = vld [vmem:[#allocation5 + $0x4] sm:$0x3]
    %v70 = vld [vmem:[#allocation5 + $0x6] sm:$0x3]
    %v71 = vld [vmem:[#allocation5 + $0x8] sm:$0x3]
    %v72 = vld [vmem:[#allocation5 + $0xa] sm:$0x3]
    %v73 = vld [vmem:[#allocation5 + $0xc] sm:$0x3]
    %v74 = vld [vmem:[#allocation5 + $0xe] sm:$0x3]
    %v75 = vld [vmem:[#allocation8] sm:$0xff]
    %v76 = vld [vmem:[#allocation8 + $0x8] sm:$0xff]
    %v77 = vld [vmem:[#allocation8 + $0x10] sm:$0xff]
    %v78 = vld [vmem:[#allocation8 + $0x18] sm:$0xff]
    %v79 = vld [vmem:[%s3] sm:$0x1]
    %v81 = vlaneseq
    %v82 = vshrl.u32 %v81, 7
    %v83 = vsub.s32 0, %v82
    %v84 = vrot.slane %v79, %v83
    %v94 = vcombine.low %v67, %v68
    %v95 = vcombine.low %v69, %v70
    %v97 = vunpack.c.l.s4 1983009808
    %v98 = vunpack.c.0.s8 %v97
    %v99 = vlaneseq
    %v100 = vshrl.u32 %v99, 7
    %v101 = vsub.s32 %v98, %v100
    %v102 = vrot.slane %v94, %v101
    %v104 = vunpack.c.l.s4 1983009808
    %v105 = vunpack.c.0.s8 %v104
    %v106 = vlaneseq
    %v107 = vshrl.u32 %v106, 7
    %v108 = vsub.s32 %v105, %v107
    %v109 = vrot.slane %v95, %v108
    %v110 = vcombine.low %v102, %v109
    %v111 = vcombine.low %v71, %v72
    %v112 = vcombine.low %v73, %v74
    %v114 = vunpack.c.l.s4 1983009808
    %v115 = vunpack.c.0.s8 %v114
    %v116 = vlaneseq
    %v117 = vshrl.u32 %v116, 7
    %v118 = vsub.s32 %v115, %v117
    %v119 = vrot.slane %v111, %v118
    %v121 = vunpack.c.l.s4 1983009808
    %v122 = vunpack.c.0.s8 %v121
    %v123 = vlaneseq
    %v124 = vshrl.u32 %v123, 7
    %v125 = vsub.s32 %v122, %v124
    %v126 = vrot.slane %v112, %v125
    %v127 = vcombine.low %v119, %v126
    %vm128 = vcmask 261120
    %v129 = vsel %vm128, %v110, 0
    %v131 = vsel %vm128, %v127, 0
    %133 = vmatprep.subr.mxu0 0.0
    %134 = vmatpush1.msra.mxu0 %v75
    %135 = vmatprep.subr.mxu0 0.0
    %136 = vmatpush1.msra.mxu0 %v76
    %137 = vmatprep.subr.mxu0 0.0
    %138 = vmatpush1.msra.mxu0 %v77
    %139 = vmatprep.subr.mxu0 0.0
    %140 = vmatpush1.msra.mxu0 %v78
    %141 = vmatprep.subr.mxu0 0.0
    %142 = vmatpush1.msra.mxu0 0.0
    %143 = vmatprep.subr.mxu0 0.0
    %144 = vmatpush1.msra.mxu0 0.0
    %145 = vmatprep.subr.mxu0 0.0
    %146 = vmatpush1.msra.mxu0 0.0
    %147 = vmatprep.subr.mxu0 0.0
    %148 = vmatpush1.msra.mxu0 0.0
    %149 = vmatprep.subr.mxu0 0.0
    %150 = vmatpush1.msra.mxu0 0.0
    %151 = vmatprep.subr.mxu0 0.0
    %152 = vmatpush1.msra.mxu0 0.0
    %153 = vmatprep.subr.mxu0 0.0
    %154 = vmatpush1.msra.mxu0 0.0
    %155 = vmatprep.subr.mxu0 0.0
    %156 = vmatpush1.msra.mxu0 0.0
    %157 = vmatprep.subr.mxu0 0.0
    %158 = vmatpush1.msra.mxu0 0.0
    %159 = vmatprep.subr.mxu0 0.0
    %160 = vmatpush1.msra.mxu0 0.0
    %161 = vmatprep.subr.mxu0 0.0
    %162 = vmatpush1.msra.mxu0 0.0
    %163 = vmatprep.subr.mxu0 0.0
    %164 = vmatpush1.msra.mxu0 0.0
    %165 = vmatprep.subr.mxu0 0.0
    %166 = vmatpush1.msra.mxu0 0.0
    %167 = vmatprep.subr.mxu0 0.0
    %168 = vmatpush1.msra.mxu0 0.0
    %169 = vmatprep.subr.mxu0 0.0
    %170 = vmatpush1.msra.mxu0 0.0
    %171 = vmatprep.subr.mxu0 0.0
    %172 = vmatpush1.msra.mxu0 0.0
    %173 = vmatprep.subr.mxu0 0.0
    %174 = vmatpush1.msra.mxu0 0.0
    %175 = vmatprep.subr.mxu0 0.0
    %176 = vmatpush1.msra.mxu0 0.0
    %177 = vmatprep.subr.mxu0 0.0
    %178 = vmatpush1.msra.mxu0 0.0
    %179 = vmatprep.subr.mxu0 0.0
    %180 = vmatpush1.msra.mxu0 0.0
    %181 = vmatprep.subr.mxu0 0.0
    %182 = vmatpush1.msra.mxu0 0.0
    %183 = vmatprep.subr.mxu0 0.0
    %184 = vmatpush1.msra.mxu0 0.0
    %185 = vmatprep.subr.mxu0 0.0
    %186 = vmatpush1.msra.mxu0 0.0
    %187 = vmatprep.subr.mxu0 0.0
    %188 = vmatpush1.msra.mxu0 0.0
    %189 = vmatprep.subr.mxu0 0.0
    %190 = vmatpush1.msra.mxu0 0.0
    %191 = vmatprep.subr.mxu0 0.0
    %192 = vmatpush1.msra.mxu0 0.0
    %193 = vmatprep.subr.mxu0 0.0
    %194 = vmatpush1.msra.mxu0 0.0
    %195 = vmatprep.subr.mxu0 0.0
    %196 = vmatpush1.msra.mxu0 0.0
    %197 = vmatprep.mubr.f32.mxu0 0.0
    %198 = vmatmul.mubr.f32.gmra.mrb[0].mxu0 %v129
    %v199 = vpop.f32.mrb[0].mxu0
    %v200 = vadd.f32 %v84, %v199
    %v201 = vpop.f32.mrb[0].mxu0
    %202 = vmatprep.mubr.f32.mxu0 0.0
    %203 = vmatmul.mubr.f32.gmra.mrb[0].mxu0 %v131
    %v204 = vpop.f32.mrb[0].mxu0
    %v205 = vadd.f32 %v84, %v204
    %v206 = vpop.f32.mrb[0].mxu0
    %207 = vdwg.mxu0
    %v210 = vcombine.high %v200, %v200
    %v212 = vunpack.c.l.s4 1983009808
    %v213 = vunpack.c.0.s8 %v212
    %v214 = vlaneseq
    %v215 = vshrl.u32 %v214, 7
    %v216 = vsub.s32 %v213, %v215
    %v217 = vrot.slane %v200, %v216
    %v219 = vunpack.c.l.s4 1983009808
    %v220 = vunpack.c.0.s8 %v219
    %v221 = vlaneseq
    %v222 = vshrl.u32 %v221, 7
    %v223 = vsub.s32 %v220, %v222
    %v224 = vrot.slane %v210, %v223
    %v225 = vcombine.high %v217, %v217
    %v226 = vcombine.high %v224, %v224
    %v227 = vcombine.high %v205, %v205
    %v229 = vunpack.c.l.s4 1983009808
    %v230 = vunpack.c.0.s8 %v229
    %v231 = vlaneseq
    %v232 = vshrl.u32 %v231, 7
    %v233 = vsub.s32 %v230, %v232
    %v234 = vrot.slane %v205, %v233
    %v236 = vunpack.c.l.s4 1983009808
    %v237 = vunpack.c.0.s8 %v236
    %v238 = vlaneseq
    %v239 = vshrl.u32 %v238, 7
    %v240 = vsub.s32 %v237, %v239
    %v241 = vrot.slane %v227, %v240
    %v242 = vcombine.high %v234, %v234
    %v243 = vcombine.high %v241, %v241
    %252 = vst [vmem:[#allocation2] sm:$0x3] %v217
    %253 = vst [vmem:[#allocation2 + $0x2] sm:$0x3] %v225
    %254 = vst [vmem:[#allocation2 + $0x4] sm:$0x3] %v224
    %255 = vst [vmem:[#allocation2 + $0x6] sm:$0x3] %v226
    %256 = vst [vmem:[#allocation2 + $0x8] sm:$0x3] %v234
    %257 = vst [vmem:[#allocation2 + $0xa] sm:$0x3] %v242
    %258 = vst [vmem:[#allocation2 + $0xc] sm:$0x3] %v241
    %259 = vst [vmem:[#allocation2 + $0xe] sm:$0x3] %v243
    %v260 = vld [vmem:[#allocation10] sm:$0xff]
    %v261 = vld [vmem:[#allocation10 + $0x8] sm:$0xff]
    %v262 = vld [vmem:[#allocation10 + $0x10] sm:$0xff]
    %v263 = vld [vmem:[#allocation10 + $0x18] sm:$0xff]
    %v264 = vld [vmem:[#allocation2] sm:$0x3]
    %v266 = vsel %vm128, 0.0, 0
    %268 = vmatprep.subr.mxu0 0.0
    %269 = vmatpush1.msra.mxu0 %v260
    %270 = vmatprep.subr.mxu0 0.0
    %271 = vmatpush1.msra.mxu0 %v261
    %272 = vmatprep.subr.mxu0 0.0
    %273 = vmatpush1.msra.mxu0 %v262
    %274 = vmatprep.subr.mxu0 0.0
    %275 = vmatpush1.msra.mxu0 %v263
    %276 = vmatprep.subr.mxu0 0.0
    %277 = vmatpush1.msra.mxu0 0.0
    %278 = vmatprep.subr.mxu0 0.0
    %279 = vmatpush1.msra.mxu0 0.0
    %280 = vmatprep.subr.mxu0 0.0
    %281 = vmatpush1.msra.mxu0 0.0
    %282 = vmatprep.subr.mxu0 0.0
    %283 = vmatpush1.msra.mxu0 0.0
    %284 = vmatprep.subr.mxu0 0.0
    %285 = vmatpush1.msra.mxu0 0.0
    %286 = vmatprep.subr.mxu0 0.0
    %287 = vmatpush1.msra.mxu0 0.0
    %288 = vmatprep.subr.mxu0 0.0
    %289 = vmatpush1.msra.mxu0 0.0
    %290 = vmatprep.subr.mxu0 0.0
    %291 = vmatpush1.msra.mxu0 0.0
    %292 = vmatprep.subr.mxu0 0.0
    %293 = vmatpush1.msra.mxu0 0.0
    %294 = vmatprep.subr.mxu0 0.0
    %295 = vmatpush1.msra.mxu0 0.0
    %296 = vmatprep.subr.mxu0 0.0
    %297 = vmatpush1.msra.mxu0 0.0
    %298 = vmatprep.subr.mxu0 0.0
    %299 = vmatpush1.msra.mxu0 0.0
    %300 = vmatprep.subr.mxu0 0.0
    %301 = vmatpush1.msra.mxu0 0.0
    %302 = vmatprep.subr.mxu0 0.0
    %303 = vmatpush1.msra.mxu0 0.0
    %304 = vmatprep.subr.mxu0 0.0
    %305 = vmatpush1.msra.mxu0 0.0
    %306 = vmatprep.subr.mxu0 0.0
    %307 = vmatpush1.msra.mxu0 0.0
    %308 = vmatprep.subr.mxu0 0.0
    %309 = vmatpush1.msra.mxu0 0.0
    %310 = vmatprep.subr.mxu0 0.0
    %311 = vmatpush1.msra.mxu0 0.0
    %312 = vmatprep.subr.mxu0 0.0
    %313 = vmatpush1.msra.mxu0 0.0
    %314 = vmatprep.subr.mxu0 0.0
    %315 = vmatpush1.msra.mxu0 0.0
    %316 = vmatprep.subr.mxu0 0.0
    %317 = vmatpush1.msra.mxu0 0.0
    %318 = vmatprep.subr.mxu0 0.0
    %319 = vmatpush1.msra.mxu0 0.0
    %320 = vmatprep.subr.mxu0 0.0
    %321 = vmatpush1.msra.mxu0 0.0
    %322 = vmatprep.subr.mxu0 0.0
    %323 = vmatpush1.msra.mxu0 0.0
    %324 = vmatprep.subr.mxu0 0.0
    %325 = vmatpush1.msra.mxu0 0.0
    %326 = vmatprep.subr.mxu0 0.0
    %327 = vmatpush1.msra.mxu0 0.0
    %328 = vmatprep.subr.mxu0 0.0
    %329 = vmatpush1.msra.mxu0 0.0
    %330 = vmatprep.subr.mxu0 0.0
    %331 = vmatpush1.msra.mxu0 0.0
    %332 = vmatprep.mubr.f32.mxu0 0.0
    %333 = vmatmul.mubr.f32.gmra.mrb[0].mxu0 %v266
    %v334 = vpop.f32.mrb[0].mxu0
    %v335 = vadd.f32 0.0, %v334
    %v336 = vpop.f32.mrb[0].mxu0
    %337 = vdwg.mxu0
    %v338 = vadd.f32 %v264, %v335
    %v339 = vxor.u32 %v338, 2147483648
    %v340 = vmul.f32 %v339, 1.442695
    %v341 = vpow.pop %v340
    %v342 = vadd.f32 %v341, 1.0
    %v343 = vrcp.pop %v342
    %v344 = vmul.f32 1.0, %v343
    %v345 = vtanh.pop %v338
    %v346 = vmul.f32 %v344, 0.0
    %348 = vrot.lane.b32.xlu0 %v345, 64
    %v349 = vpop.permute.xlu0 %348
    %v351 = vmul.f32 %v344, %v349
    %353 = vrot.lane.b32.xlu0 %v351, 32
    %v354 = vpop.permute.xlu0 %353
    %v356 = vadd.f32 %v346, %v354
    %v357 = vtanh.pop %v356
    %359 = vrot.lane.b32.xlu0 %v357, 64
    %v360 = vpop.permute.xlu0 %359
    %v362 = vmul.f32 %v344, %v360
    %364 = vrot.lane.b32.xlu0 %v362, 32
    %v365 = vpop.permute.xlu0 %364
    %vm367 = vcmask 254976
    %368 = vst.msk [vmem:[#allocation3] sm:$0x3] %vm367, %v365
    %s369 = scalar_lea.vmem [#allocation2], 2
    %v370 = vld [vmem:[%s369] sm:$0x3]
    %v371 = vsel %vm128, %v365, 0
    %373 = vmatprep.subr.mxu0 0.0
    %374 = vmatpush1.msra.mxu0 %v260
    %375 = vmatprep.subr.mxu0 0.0
    %376 = vmatpush1.msra.mxu0 %v261
    %377 = vmatprep.subr.mxu0 0.0
    %378 = vmatpush1.msra.mxu0 %v262
    %379 = vmatprep.subr.mxu0 0.0
    %380 = vmatpush1.msra.mxu0 %v263
    %381 = vmatprep.subr.mxu0 0.0
    %382 = vmatpush1.msra.mxu0 0.0
    %383 = vmatprep.subr.mxu0 0.0
    %384 = vmatpush1.msra.mxu0 0.0
    %385 = vmatprep.subr.mxu0 0.0
    %386 = vmatpush1.msra.mxu0 0.0
    %387 = vmatprep.subr.mxu0 0.0
    %388 = vmatpush1.msra.mxu0 0.0
    %389 = vmatprep.subr.mxu0 0.0
    %390 = vmatpush1.msra.mxu0 0.0
    %391 = vmatprep.subr.mxu0 0.0
    %392 = vmatpush1.msra.mxu0 0.0
    %393 = vmatprep.subr.mxu0 0.0
    %394 = vmatpush1.msra.mxu0 0.0
    %395 = vmatprep.subr.mxu0 0.0
    %396 = vmatpush1.msra.mxu0 0.0
    %397 = vmatprep.subr.mxu0 0.0
    %398 = vmatpush1.msra.mxu0 0.0
    %399 = vmatprep.subr.mxu0 0.0
    %400 = vmatpush1.msra.mxu0 0.0
    %401 = vmatprep.subr.mxu0 0.0
    %402 = vmatpush1.msra.mxu0 0.0
    %403 = vmatprep.subr.mxu0 0.0
    %404 = vmatpush1.msra.mxu0 0.0
    %405 = vmatprep.subr.mxu0 0.0
    %406 = vmatpush1.msra.mxu0 0.0
    %407 = vmatprep.subr.mxu0 0.0
    %408 = vmatpush1.msra.mxu0 0.0
    %409 = vmatprep.subr.mxu0 0.0
    %410 = vmatpush1.msra.mxu0 0.0
    %411 = vmatprep.subr.mxu0 0.0
    %412 = vmatpush1.msra.mxu0 0.0
    %413 = vmatprep.subr.mxu0 0.0
    %414 = vmatpush1.msra.mxu0 0.0
    %415 = vmatprep.subr.mxu0 0.0
    %416 = vmatpush1.msra.mxu0 0.0
    %417 = vmatprep.subr.mxu0 0.0
    %418 = vmatpush1.msra.mxu0 0.0
    %419 = vmatprep.subr.mxu0 0.0
    %420 = vmatpush1.msra.mxu0 0.0
    %421 = vmatprep.subr.mxu0 0.0
    %422 = vmatpush1.msra.mxu0 0.0
    %423 = vmatprep.subr.mxu0 0.0
    %424 = vmatpush1.msra.mxu0 0.0
    %425 = vmatprep.subr.mxu0 0.0
    %426 = vmatpush1.msra.mxu0 0.0
    %427 = vmatprep.subr.mxu0 0.0
    %428 = vmatpush1.msra.mxu0 0.0
    %429 = vmatprep.subr.mxu0 0.0
    %430 = vmatpush1.msra.mxu0 0.0
    %431 = vmatprep.subr.mxu0 0.0
    %432 = vmatpush1.msra.mxu0 0.0
    %433 = vmatprep.subr.mxu0 0.0
    %434 = vmatpush1.msra.mxu0 0.0
    %435 = vmatprep.subr.mxu0 0.0
    %436 = vmatpush1.msra.mxu0 0.0
    %437 = vmatprep.mubr.f32.mxu0 0.0
    %438 = vmatmul.mubr.f32.gmra.mrb[0].mxu0 %v371
    %v439 = vpop.f32.mrb[0].mxu0
    %v440 = vadd.f32 0.0, %v439
    %v441 = vpop.f32.mrb[0].mxu0
    %442 = vdwg.mxu0
    %v443 = vadd.f32 %v370, %v440
    %v444 = vxor.u32 %v443, 2147483648
    %v445 = vmul.f32 %v444, 1.442695
    %v446 = vpow.pop %v445
    %v447 = vadd.f32 %v446, 1.0
    %v448 = vrcp.pop %v447
    %v449 = vmul.f32 1.0, %v448
    %v450 = vtanh.pop %v443
    %v451 = vmul.f32 %v449, %v356
    %453 = vrot.lane.b32.xlu0 %v450, 64
    %v454 = vpop.permute.xlu0 %453
    %v456 = vmul.f32 %v449, %v454
    %458 = vrot.lane.b32.xlu0 %v456, 32
    %v459 = vpop.permute.xlu0 %458
    %v461 = vadd.f32 %v451, %v459
    %v462 = vtanh.pop %v461
    %464 = vrot.lane.b32.xlu0 %v462, 64
    %v465 = vpop.permute.xlu0 %464
    %v467 = vmul.f32 %v449, %v465
    %469 = vrot.lane.b32.xlu0 %v467, 32
    %v470 = vpop.permute.xlu0 %469
    %s472 = scalar_lea.vmem [#allocation3], 2
    %473 = vst.msk [vmem:[%s472] sm:$0x3] %vm367, %v470
    %s474 = scalar_lea.vmem [#allocation2], 4
    %v475 = vld [vmem:[%s474] sm:$0x3]
    %v476 = vsel %vm128, %v470, 0
    %478 = vmatprep.subr.mxu0 0.0
    %479 = vmatpush1.msra.mxu0 %v260
    %480 = vmatprep.subr.mxu0 0.0
    %481 = vmatpush1.msra.mxu0 %v261
    %482 = vmatprep.subr.mxu0 0.0
    %483 = vmatpush1.msra.mxu0 %v262
    %484 = vmatprep.subr.mxu0 0.0
    %485 = vmatpush1.msra.mxu0 %v263
    %486 = vmatprep.subr.mxu0 0.0
    %487 = vmatpush1.msra.mxu0 0.0
    %488 = vmatprep.subr.mxu0 0.0
    %489 = vmatpush1.msra.mxu0 0.0
    %490 = vmatprep.subr.mxu0 0.0
    %491 = vmatpush1.msra.mxu0 0.0
    %492 = vmatprep.subr.mxu0 0.0
    %493 = vmatpush1.msra.mxu0 0.0
    %494 = vmatprep.subr.mxu0 0.0
    %495 = vmatpush1.msra.mxu0 0.0
    %496 = vmatprep.subr.mxu0 0.0
    %497 = vmatpush1.msra.mxu0 0.0
    %498 = vmatprep.subr.mxu0 0.0
    %499 = vmatpush1.msra.mxu0 0.0
    %500 = vmatprep.subr.mxu0 0.0
    %501 = vmatpush1.msra.mxu0 0.0
    %502 = vmatprep.subr.mxu0 0.0
    %503 = vmatpush1.msra.mxu0 0.0
    %504 = vmatprep.subr.mxu0 0.0
    %505 = vmatpush1.msra.mxu0 0.0
    %506 = vmatprep.subr.mxu0 0.0
    %507 = vmatpush1.msra.mxu0 0.0
    %508 = vmatprep.subr.mxu0 0.0
    %509 = vmatpush1.msra.mxu0 0.0
    %510 = vmatprep.subr.mxu0 0.0
    %511 = vmatpush1.msra.mxu0 0.0
    %512 = vmatprep.subr.mxu0 0.0
    %513 = vmatpush1.msra.mxu0 0.0
    %514 = vmatprep.subr.mxu0 0.0
    %515 = vmatpush1.msra.mxu0 0.0
    %516 = vmatprep.subr.mxu0 0.0
    %517 = vmatpush1.msra.mxu0 0.0
    %518 = vmatprep.subr.mxu0 0.0
    %519 = vmatpush1.msra.mxu0 0.0
    %520 = vmatprep.subr.mxu0 0.0
    %521 = vmatpush1.msra.mxu0 0.0
    %522 = vmatprep.subr.mxu0 0.0
    %523 = vmatpush1.msra.mxu0 0.0
    %524 = vmatprep.subr.mxu0 0.0
    %525 = vmatpush1.msra.mxu0 0.0
    %526 = vmatprep.subr.mxu0 0.0
    %527 = vmatpush1.msra.mxu0 0.0
    %528 = vmatprep.subr.mxu0 0.0
    %529 = vmatpush1.msra.mxu0 0.0
    %530 = vmatprep.subr.mxu0 0.0
    %531 = vmatpush1.msra.mxu0 0.0
    %532 = vmatprep.subr.mxu0 0.0
    %533 = vmatpush1.msra.mxu0 0.0
    %534 = vmatprep.subr.mxu0 0.0
    %535 = vmatpush1.msra.mxu0 0.0
    %536 = vmatprep.subr.mxu0 0.0
    %537 = vmatpush1.msra.mxu0 0.0
    %538 = vmatprep.subr.mxu0 0.0
    %539 = vmatpush1.msra.mxu0 0.0
    %540 = vmatprep.subr.mxu0 0.0
    %541 = vmatpush1.msra.mxu0 0.0
    %542 = vmatprep.mubr.f32.mxu0 0.0
    %543 = vmatmul.mubr.f32.gmra.mrb[0].mxu0 %v476
    %v544 = vpop.f32.mrb[0].mxu0
    %v545 = vadd.f32 0.0, %v544
    %v546 = vpop.f32.mrb[0].mxu0
    %547 = vdwg.mxu0
    %v548 = vadd.f32 %v475, %v545
    %v549 = vxor.u32 %v548, 2147483648
    %v550 = vmul.f32 %v549, 1.442695
    %v551 = vpow.pop %v550
    %v552 = vadd.f32 %v551, 1.0
    %v553 = vrcp.pop %v552
    %v554 = vmul.f32 1.0, %v553
    %v555 = vtanh.pop %v548
    %v556 = vmul.f32 %v554, %v461
    %558 = vrot.lane.b32.xlu0 %v555, 64
    %v559 = vpop.permute.xlu0 %558
    %v561 = vmul.f32 %v554, %v559
    %563 = vrot.lane.b32.xlu0 %v561, 32
    %v564 = vpop.permute.xlu0 %563
    %v566 = vadd.f32 %v556, %v564
    %v567 = vtanh.pop %v566
    %569 = vrot.lane.b32.xlu0 %v567, 64
    %v570 = vpop.permute.xlu0 %569
    %v572 = vmul.f32 %v554, %v570
    %574 = vrot.lane.b32.xlu0 %v572, 32
    %v575 = vpop.permute.xlu0 %574
    %s577 = scalar_lea.vmem [#allocation3], 4
    %578 = vst.msk [vmem:[%s577] sm:$0x3] %vm367, %v575
    %s579 = scalar_lea.vmem [#allocation2], 6
    %v580 = vld [vmem:[%s579] sm:$0x3]
    %v581 = vsel %vm128, %v575, 0
    %583 = vmatprep.subr.mxu0 0.0
    %584 = vmatpush1.msra.mxu0 %v260
    %585 = vmatprep.subr.mxu0 0.0
    %586 = vmatpush1.msra.mxu0 %v261
    %587 = vmatprep.subr.mxu0 0.0
    %588 = vmatpush1.msra.mxu0 %v262
    %589 = vmatprep.subr.mxu0 0.0
    %590 = vmatpush1.msra.mxu0 %v263
    %591 = vmatprep.subr.mxu0 0.0
    %592 = vmatpush1.msra.mxu0 0.0
    %593 = vmatprep.subr.mxu0 0.0
    %594 = vmatpush1.msra.mxu0 0.0
    %595 = vmatprep.subr.mxu0 0.0
    %596 = vmatpush1.msra.mxu0 0.0
    %597 = vmatprep.subr.mxu0 0.0
    %598 = vmatpush1.msra.mxu0 0.0
    %599 = vmatprep.subr.mxu0 0.0
    %600 = vmatpush1.msra.mxu0 0.0
    %601 = vmatprep.subr.mxu0 0.0
    %602 = vmatpush1.msra.mxu0 0.0
    %603 = vmatprep.subr.mxu0 0.0
    %604 = vmatpush1.msra.mxu0 0.0
    %605 = vmatprep.subr.mxu0 0.0
    %606 = vmatpush1.msra.mxu0 0.0
    %607 = vmatprep.subr.mxu0 0.0
    %608 = vmatpush1.msra.mxu0 0.0
    %609 = vmatprep.subr.mxu0 0.0
    %610 = vmatpush1.msra.mxu0 0.0
    %611 = vmatprep.subr.mxu0 0.0
    %612 = vmatpush1.msra.mxu0 0.0
    %613 = vmatprep.subr.mxu0 0.0
    %614 = vmatpush1.msra.mxu0 0.0
    %615 = vmatprep.subr.mxu0 0.0
    %616 = vmatpush1.msra.mxu0 0.0
    %617 = vmatprep.subr.mxu0 0.0
    %618 = vmatpush1.msra.mxu0 0.0
    %619 = vmatprep.subr.mxu0 0.0
    %620 = vmatpush1.msra.mxu0 0.0
    %621 = vmatprep.subr.mxu0 0.0
    %622 = vmatpush1.msra.mxu0 0.0
    %623 = vmatprep.subr.mxu0 0.0
    %624 = vmatpush1.msra.mxu0 0.0
    %625 = vmatprep.subr.mxu0 0.0
    %626 = vmatpush1.msra.mxu0 0.0
    %627 = vmatprep.subr.mxu0 0.0
    %628 = vmatpush1.msra.mxu0 0.0
    %629 = vmatprep.subr.mxu0 0.0
    %630 = vmatpush1.msra.mxu0 0.0
    %631 = vmatprep.subr.mxu0 0.0
    %632 = vmatpush1.msra.mxu0 0.0
    %633 = vmatprep.subr.mxu0 0.0
    %634 = vmatpush1.msra.mxu0 0.0
    %635 = vmatprep.subr.mxu0 0.0
    %636 = vmatpush1.msra.mxu0 0.0
    %637 = vmatprep.subr.mxu0 0.0
    %638 = vmatpush1.msra.mxu0 0.0
    %639 = vmatprep.subr.mxu0 0.0
    %640 = vmatpush1.msra.mxu0 0.0
    %641 = vmatprep.subr.mxu0 0.0
    %642 = vmatpush1.msra.mxu0 0.0
    %643 = vmatprep.subr.mxu0 0.0
    %644 = vmatpush1.msra.mxu0 0.0
    %645 = vmatprep.subr.mxu0 0.0
    %646 = vmatpush1.msra.mxu0 0.0
    %647 = vmatprep.mubr.f32.mxu0 0.0
    %648 = vmatmul.mubr.f32.gmra.mrb[0].mxu0 %v581
    %v649 = vpop.f32.mrb[0].mxu0
    %v650 = vadd.f32 0.0, %v649
    %v651 = vpop.f32.mrb[0].mxu0
    %652 = vdwg.mxu0
    %v653 = vadd.f32 %v580, %v650
    %v654 = vxor.u32 %v653, 2147483648
    %v655 = vmul.f32 %v654, 1.442695
    %v656 = vpow.pop %v655
    %v657 = vadd.f32 %v656, 1.0
    %v658 = vrcp.pop %v657
    %v659 = vmul.f32 1.0, %v658
    %v660 = vtanh.pop %v653
    %v661 = vmul.f32 %v659, %v566
    %663 = vrot.lane.b32.xlu0 %v660, 64
    %v664 = vpop.permute.xlu0 %663
    %v666 = vmul.f32 %v659, %v664
    %668 = vrot.lane.b32.xlu0 %v666, 32
    %v669 = vpop.permute.xlu0 %668
    %v671 = vadd.f32 %v661, %v669
    %v672 = vtanh.pop %v671
    %674 = vrot.lane.b32.xlu0 %v672, 64
    %v675 = vpop.permute.xlu0 %674
    %v677 = vmul.f32 %v659, %v675
    %679 = vrot.lane.b32.xlu0 %v677, 32
    %v680 = vpop.permute.xlu0 %679
    %s682 = scalar_lea.vmem [#allocation3], 6
    %683 = vst.msk [vmem:[%s682] sm:$0x3] %vm367, %v680
    %s684 = scalar_lea.vmem [#allocation2], 8
    %v685 = vld [vmem:[%s684] sm:$0x3]
    %v686 = vsel %vm128, %v680, 0
    %688 = vmatprep.subr.mxu0 0.0
    %689 = vmatpush1.msra.mxu0 %v260
    %690 = vmatprep.subr.mxu0 0.0
    %691 = vmatpush1.msra.mxu0 %v261
    %692 = vmatprep.subr.mxu0 0.0
    %693 = vmatpush1.msra.mxu0 %v262
    %694 = vmatprep.subr.mxu0 0.0
    %695 = vmatpush1.msra.mxu0 %v263
    %696 = vmatprep.subr.mxu0 0.0
    %697 = vmatpush1.msra.mxu0 0.0
    %698 = vmatprep.subr.mxu0 0.0
    %699 = vmatpush1.msra.mxu0 0.0
    %700 = vmatprep.subr.mxu0 0.0
    %701 = vmatpush1.msra.mxu0 0.0
    %702 = vmatprep.subr.mxu0 0.0
    %703 = vmatpush1.msra.mxu0 0.0
    %704 = vmatprep.subr.mxu0 0.0
    %705 = vmatpush1.msra.mxu0 0.0
    %706 = vmatprep.subr.mxu0 0.0
    %707 = vmatpush1.msra.mxu0 0.0
    %708 = vmatprep.subr.mxu0 0.0
    %709 = vmatpush1.msra.mxu0 0.0
    %710 = vmatprep.subr.mxu0 0.0
    %711 = vmatpush1.msra.mxu0 0.0
    %712 = vmatprep.subr.mxu0 0.0
    %713 = vmatpush1.msra.mxu0 0.0
    %714 = vmatprep.subr.mxu0 0.0
    %715 = vmatpush1.msra.mxu0 0.0
    %716 = vmatprep.subr.mxu0 0.0
    %717 = vmatpush1.msra.mxu0 0.0
    %718 = vmatprep.subr.mxu0 0.0
    %719 = vmatpush1.msra.mxu0 0.0
    %720 = vmatprep.subr.mxu0 0.0
    %721 = vmatpush1.msra.mxu0 0.0
    %722 = vmatprep.subr.mxu0 0.0
    %723 = vmatpush1.msra.mxu0 0.0
    %724 = vmatprep.subr.mxu0 0.0
    %725 = vmatpush1.msra.mxu0 0.0
    %726 = vmatprep.subr.mxu0 0.0
    %727 = vmatpush1.msra.mxu0 0.0
    %728 = vmatprep.subr.mxu0 0.0
    %729 = vmatpush1.msra.mxu0 0.0
    %730 = vmatprep.subr.mxu0 0.0
    %731 = vmatpush1.msra.mxu0 0.0
    %732 = vmatprep.subr.mxu0 0.0
    %733 = vmatpush1.msra.mxu0 0.0
    %734 = vmatprep.subr.mxu0 0.0
    %735 = vmatpush1.msra.mxu0 0.0
    %736 = vmatprep.subr.mxu0 0.0
    %737 = vmatpush1.msra.mxu0 0.0
    %738 = vmatprep.subr.mxu0 0.0
    %739 = vmatpush1.msra.mxu0 0.0
    %740 = vmatprep.subr.mxu0 0.0
    %741 = vmatpush1.msra.mxu0 0.0
    %742 = vmatprep.subr.mxu0 0.0
    %743 = vmatpush1.msra.mxu0 0.0
    %744 = vmatprep.subr.mxu0 0.0
    %745 = vmatpush1.msra.mxu0 0.0
    %746 = vmatprep.subr.mxu0 0.0
    %747 = vmatpush1.msra.mxu0 0.0
    %748 = vmatprep.subr.mxu0 0.0
    %749 = vmatpush1.msra.mxu0 0.0
    %750 = vmatprep.subr.mxu0 0.0
    %751 = vmatpush1.msra.mxu0 0.0
    %752 = vmatprep.mubr.f32.mxu0 0.0
    %753 = vmatmul.mubr.f32.gmra.mrb[0].mxu0 %v686
    %v754 = vpop.f32.mrb[0].mxu0
    %v755 = vadd.f32 0.0, %v754
    %v756 = vpop.f32.mrb[0].mxu0
    %757 = vdwg.mxu0
    %v758 = vadd.f32 %v685, %v755
    %v759 = vxor.u32 %v758, 2147483648
    %v760 = vmul.f32 %v759, 1.442695
    %v761 = vpow.pop %v760
    %v762 = vadd.f32 %v761, 1.0
    %v763 = vrcp.pop %v762
    %v764 = vmul.f32 1.0, %v763
    %v765 = vtanh.pop %v758
    %v766 = vmul.f32 %v764, %v671
    %768 = vrot.lane.b32.xlu0 %v765, 64
    %v769 = vpop.permute.xlu0 %768
    %v771 = vmul.f32 %v764, %v769
    %773 = vrot.lane.b32.xlu0 %v771, 32
    %v774 = vpop.permute.xlu0 %773
    %v776 = vadd.f32 %v766, %v774
    %v777 = vtanh.pop %v776
    %779 = vrot.lane.b32.xlu0 %v777, 64
    %v780 = vpop.permute.xlu0 %779
    %v782 = vmul.f32 %v764, %v780
    %784 = vrot.lane.b32.xlu0 %v782, 32
    %v785 = vpop.permute.xlu0 %784
    %s787 = scalar_lea.vmem [#allocation3], 8
    %788 = vst.msk [vmem:[%s787] sm:$0x3] %vm367, %v785
    %s789 = scalar_lea.vmem [#allocation2], 10
    %v790 = vld [vmem:[%s789] sm:$0x3]
    %v791 = vsel %vm128, %v785, 0
    %793 = vmatprep.subr.mxu0 0.0
    %794 = vmatpush1.msra.mxu0 %v260
    %795 = vmatprep.subr.mxu0 0.0
    %796 = vmatpush1.msra.mxu0 %v261
    %797 = vmatprep.subr.mxu0 0.0
    %798 = vmatpush1.msra.mxu0 %v262
    %799 = vmatprep.subr.mxu0 0.0
    %800 = vmatpush1.msra.mxu0 %v263
    %801 = vmatprep.subr.mxu0 0.0
    %802 = vmatpush1.msra.mxu0 0.0
    %803 = vmatprep.subr.mxu0 0.0
    %804 = vmatpush1.msra.mxu0 0.0
    %805 = vmatprep.subr.mxu0 0.0
    %806 = vmatpush1.msra.mxu0 0.0
    %807 = vmatprep.subr.mxu0 0.0
    %808 = vmatpush1.msra.mxu0 0.0
    %809 = vmatprep.subr.mxu0 0.0
    %810 = vmatpush1.msra.mxu0 0.0
    %811 = vmatprep.subr.mxu0 0.0
    %812 = vmatpush1.msra.mxu0 0.0
    %813 = vmatprep.subr.mxu0 0.0
    %814 = vmatpush1.msra.mxu0 0.0
    %815 = vmatprep.subr.mxu0 0.0
    %816 = vmatpush1.msra.mxu0 0.0
    %817 = vmatprep.subr.mxu0 0.0
    %818 = vmatpush1.msra.mxu0 0.0
    %819 = vmatprep.subr.mxu0 0.0
    %820 = vmatpush1.msra.mxu0 0.0
    %821 = vmatprep.subr.mxu0 0.0
    %822 = vmatpush1.msra.mxu0 0.0
    %823 = vmatprep.subr.mxu0 0.0
    %824 = vmatpush1.msra.mxu0 0.0
    %825 = vmatprep.subr.mxu0 0.0
    %826 = vmatpush1.msra.mxu0 0.0
    %827 = vmatprep.subr.mxu0 0.0
    %828 = vmatpush1.msra.mxu0 0.0
    %829 = vmatprep.subr.mxu0 0.0
    %830 = vmatpush1.msra.mxu0 0.0
    %831 = vmatprep.subr.mxu0 0.0
    %832 = vmatpush1.msra.mxu0 0.0
    %833 = vmatprep.subr.mxu0 0.0
    %834 = vmatpush1.msra.mxu0 0.0
    %835 = vmatprep.subr.mxu0 0.0
    %836 = vmatpush1.msra.mxu0 0.0
    %837 = vmatprep.subr.mxu0 0.0
    %838 = vmatpush1.msra.mxu0 0.0
    %839 = vmatprep.subr.mxu0 0.0
    %840 = vmatpush1.msra.mxu0 0.0
    %841 = vmatprep.subr.mxu0 0.0
    %842 = vmatpush1.msra.mxu0 0.0
    %843 = vmatprep.subr.mxu0 0.0
    %844 = vmatpush1.msra.mxu0 0.0
    %845 = vmatprep.subr.mxu0 0.0
    %846 = vmatpush1.msra.mxu0 0.0
    %847 = vmatprep.subr.mxu0 0.0
    %848 = vmatpush1.msra.mxu0 0.0
    %849 = vmatprep.subr.mxu0 0.0
    %850 = vmatpush1.msra.mxu0 0.0
    %851 = vmatprep.subr.mxu0 0.0
    %852 = vmatpush1.msra.mxu0 0.0
    %853 = vmatprep.subr.mxu0 0.0
    %854 = vmatpush1.msra.mxu0 0.0
    %855 = vmatprep.subr.mxu0 0.0
    %856 = vmatpush1.msra.mxu0 0.0
    %857 = vmatprep.mubr.f32.mxu0 0.0
    %858 = vmatmul.mubr.f32.gmra.mrb[0].mxu0 %v791
    %v859 = vpop.f32.mrb[0].mxu0
    %v860 = vadd.f32 0.0, %v859
    %v861 = vpop.f32.mrb[0].mxu0
    %862 = vdwg.mxu0
    %v863 = vadd.f32 %v790, %v860
    %v864 = vxor.u32 %v863, 2147483648
    %v865 = vmul.f32 %v864, 1.442695
    %v866 = vpow.pop %v865
    %v867 = vadd.f32 %v866, 1.0
    %v868 = vrcp.pop %v867
    %v869 = vmul.f32 1.0, %v868
    %v870 = vtanh.pop %v863
    %v871 = vmul.f32 %v869, %v776
    %873 = vrot.lane.b32.xlu0 %v870, 64
    %v874 = vpop.permute.xlu0 %873
    %v876 = vmul.f32 %v869, %v874
    %878 = vrot.lane.b32.xlu0 %v876, 32
    %v879 = vpop.permute.xlu0 %878
    %v881 = vadd.f32 %v871, %v879
    %v882 = vtanh.pop %v881
    %884 = vrot.lane.b32.xlu0 %v882, 64
    %v885 = vpop.permute.xlu0 %884
    %v887 = vmul.f32 %v869, %v885
    %889 = vrot.lane.b32.xlu0 %v887, 32
    %v890 = vpop.permute.xlu0 %889
    %s892 = scalar_lea.vmem [#allocation3], 10
    %893 = vst.msk [vmem:[%s892] sm:$0x3] %vm367, %v890
    %s894 = scalar_lea.vmem [#allocation2], 12
    %v895 = vld [vmem:[%s894] sm:$0x3]
    %v896 = vsel %vm128, %v890, 0
    %898 = vmatprep.subr.mxu0 0.0
    %899 = vmatpush1.msra.mxu0 %v260
    %900 = vmatprep.subr.mxu0 0.0
    %901 = vmatpush1.msra.mxu0 %v261
    %902 = vmatprep.subr.mxu0 0.0
    %903 = vmatpush1.msra.mxu0 %v262
    %904 = vmatprep.subr.mxu0 0.0
    %905 = vmatpush1.msra.mxu0 %v263
    %906 = vmatprep.subr.mxu0 0.0
    %907 = vmatpush1.msra.mxu0 0.0
    %908 = vmatprep.subr.mxu0 0.0
    %909 = vmatpush1.msra.mxu0 0.0
    %910 = vmatprep.subr.mxu0 0.0
    %911 = vmatpush1.msra.mxu0 0.0
    %912 = vmatprep.subr.mxu0 0.0
    %913 = vmatpush1.msra.mxu0 0.0
    %914 = vmatprep.subr.mxu0 0.0
    %915 = vmatpush1.msra.mxu0 0.0
    %916 = vmatprep.subr.mxu0 0.0
    %917 = vmatpush1.msra.mxu0 0.0
    %918 = vmatprep.subr.mxu0 0.0
    %919 = vmatpush1.msra.mxu0 0.0
    %920 = vmatprep.subr.mxu0 0.0
    %921 = vmatpush1.msra.mxu0 0.0
    %922 = vmatprep.subr.mxu0 0.0
    %923 = vmatpush1.msra.mxu0 0.0
    %924 = vmatprep.subr.mxu0 0.0
    %925 = vmatpush1.msra.mxu0 0.0
    %926 = vmatprep.subr.mxu0 0.0
    %927 = vmatpush1.msra.mxu0 0.0
    %928 = vmatprep.subr.mxu0 0.0
    %929 = vmatpush1.msra.mxu0 0.0
    %930 = vmatprep.subr.mxu0 0.0
    %931 = vmatpush1.msra.mxu0 0.0
    %932 = vmatprep.subr.mxu0 0.0
    %933 = vmatpush1.msra.mxu0 0.0
    %934 = vmatprep.subr.mxu0 0.0
    %935 = vmatpush1.msra.mxu0 0.0
    %936 = vmatprep.subr.mxu0 0.0
    %937 = vmatpush1.msra.mxu0 0.0
    %938 = vmatprep.subr.mxu0 0.0
    %939 = vmatpush1.msra.mxu0 0.0
    %940 = vmatprep.subr.mxu0 0.0
    %941 = vmatpush1.msra.mxu0 0.0
    %942 = vmatprep.subr.mxu0 0.0
    %943 = vmatpush1.msra.mxu0 0.0
    %944 = vmatprep.subr.mxu0 0.0
    %945 = vmatpush1.msra.mxu0 0.0
    %946 = vmatprep.subr.mxu0 0.0
    %947 = vmatpush1.msra.mxu0 0.0
    %948 = vmatprep.subr.mxu0 0.0
    %949 = vmatpush1.msra.mxu0 0.0
    %950 = vmatprep.subr.mxu0 0.0
    %951 = vmatpush1.msra.mxu0 0.0
    %952 = vmatprep.subr.mxu0 0.0
    %953 = vmatpush1.msra.mxu0 0.0
    %954 = vmatprep.subr.mxu0 0.0
    %955 = vmatpush1.msra.mxu0 0.0
    %956 = vmatprep.subr.mxu0 0.0
    %957 = vmatpush1.msra.mxu0 0.0
    %958 = vmatprep.subr.mxu0 0.0
    %959 = vmatpush1.msra.mxu0 0.0
    %960 = vmatprep.subr.mxu0 0.0
    %961 = vmatpush1.msra.mxu0 0.0
    %962 = vmatprep.mubr.f32.mxu0 0.0
    %963 = vmatmul.mubr.f32.gmra.mrb[0].mxu0 %v896
    %v964 = vpop.f32.mrb[0].mxu0
    %v965 = vadd.f32 0.0, %v964
    %v966 = vpop.f32.mrb[0].mxu0
    %967 = vdwg.mxu0
    %v968 = vadd.f32 %v895, %v965
    %v969 = vxor.u32 %v968, 2147483648
    %v970 = vmul.f32 %v969, 1.442695
    %v971 = vpow.pop %v970
    %v972 = vadd.f32 %v971, 1.0
    %v973 = vrcp.pop %v972
    %v974 = vmul.f32 1.0, %v973
    %v975 = vtanh.pop %v968
    %v976 = vmul.f32 %v974, %v881
    %978 = vrot.lane.b32.xlu0 %v975, 64
    %v979 = vpop.permute.xlu0 %978
    %v981 = vmul.f32 %v974, %v979
    %983 = vrot.lane.b32.xlu0 %v981, 32
    %v984 = vpop.permute.xlu0 %983
    %v986 = vadd.f32 %v976, %v984
    %v987 = vtanh.pop %v986
    %989 = vrot.lane.b32.xlu0 %v987, 64
    %v990 = vpop.permute.xlu0 %989
    %v992 = vmul.f32 %v974, %v990
    %994 = vrot.lane.b32.xlu0 %v992, 32
    %v995 = vpop.permute.xlu0 %994
    %s997 = scalar_lea.vmem [#allocation3], 12
    %998 = vst.msk [vmem:[%s997] sm:$0x3] %vm367, %v995
    %s999 = scalar_lea.vmem [#allocation2], 14
    %v1000 = vld [vmem:[%s999] sm:$0x3]
    %v1001 = vsel %vm128, %v995, 0
    %1003 = vmatprep.subr.mxu0 0.0
    %1004 = vmatpush1.msra.mxu0 %v260
    %1005 = vmatprep.subr.mxu0 0.0
    %1006 = vmatpush1.msra.mxu0 %v261
    %1007 = vmatprep.subr.mxu0 0.0
    %1008 = vmatpush1.msra.mxu0 %v262
    %1009 = vmatprep.subr.mxu0 0.0
    %1010 = vmatpush1.msra.mxu0 %v263
    %1011 = vmatprep.subr.mxu0 0.0
    %1012 = vmatpush1.msra.mxu0 0.0
    %1013 = vmatprep.subr.mxu0 0.0
    %1014 = vmatpush1.msra.mxu0 0.0
    %1015 = vmatprep.subr.mxu0 0.0
    %1016 = vmatpush1.msra.mxu0 0.0
    %1017 = vmatprep.subr.mxu0 0.0
    %1018 = vmatpush1.msra.mxu0 0.0
    %1019 = vmatprep.subr.mxu0 0.0
    %1020 = vmatpush1.msra.mxu0 0.0
    %1021 = vmatprep.subr.mxu0 0.0
    %1022 = vmatpush1.msra.mxu0 0.0
    %1023 = vmatprep.subr.mxu0 0.0
    %1024 = vmatpush1.msra.mxu0 0.0
    %1025 = vmatprep.subr.mxu0 0.0
    %1026 = vmatpush1.msra.mxu0 0.0
    %1027 = vmatprep.subr.mxu0 0.0
    %1028 = vmatpush1.msra.mxu0 0.0
    %1029 = vmatprep.subr.mxu0 0.0
    %1030 = vmatpush1.msra.mxu0 0.0
    %1031 = vmatprep.subr.mxu0 0.0
    %1032 = vmatpush1.msra.mxu0 0.0
    %1033 = vmatprep.subr.mxu0 0.0
    %1034 = vmatpush1.msra.mxu0 0.0
    %1035 = vmatprep.subr.mxu0 0.0
    %1036 = vmatpush1.msra.mxu0 0.0
    %1037 = vmatprep.subr.mxu0 0.0
    %1038 = vmatpush1.msra.mxu0 0.0
    %1039 = vmatprep.subr.mxu0 0.0
    %1040 = vmatpush1.msra.mxu0 0.0
    %1041 = vmatprep.subr.mxu0 0.0
    %1042 = vmatpush1.msra.mxu0 0.0
    %1043 = vmatprep.subr.mxu0 0.0
    %1044 = vmatpush1.msra.mxu0 0.0
    %1045 = vmatprep.subr.mxu0 0.0
    %1046 = vmatpush1.msra.mxu0 0.0
    %1047 = vmatprep.subr.mxu0 0.0
    %1048 = vmatpush1.msra.mxu0 0.0
    %1049 = vmatprep.subr.mxu0 0.0
    %1050 = vmatpush1.msra.mxu0 0.0
    %1051 = vmatprep.subr.mxu0 0.0
    %1052 = vmatpush1.msra.mxu0 0.0
    %1053 = vmatprep.subr.mxu0 0.0
    %1054 = vmatpush1.msra.mxu0 0.0
    %1055 = vmatprep.subr.mxu0 0.0
    %1056 = vmatpush1.msra.mxu0 0.0
    %1057 = vmatprep.subr.mxu0 0.0
    %1058 = vmatpush1.msra.mxu0 0.0
    %1059 = vmatprep.subr.mxu0 0.0
    %1060 = vmatpush1.msra.mxu0 0.0
    %1061 = vmatprep.subr.mxu0 0.0
    %1062 = vmatpush1.msra.mxu0 0.0
    %1063 = vmatprep.subr.mxu0 0.0
    %1064 = vmatpush1.msra.mxu0 0.0
    %1065 = vmatprep.subr.mxu0 0.0
    %1066 = vmatpush1.msra.mxu0 0.0
    %1067 = vmatprep.mubr.f32.mxu0 0.0
    %1068 = vmatmul.mubr.f32.gmra.mrb[0].mxu0 %v1001
    %v1069 = vpop.f32.mrb[0].mxu0
    %v1070 = vadd.f32 0.0, %v1069
    %v1071 = vpop.f32.mrb[0].mxu0
    %1072 = vdwg.mxu0
    %v1073 = vadd.f32 %v1000, %v1070
    %v1074 = vxor.u32 %v1073, 2147483648
    %v1075 = vmul.f32 %v1074, 1.442695
    %v1076 = vpow.pop %v1075
    %v1077 = vadd.f32 %v1076, 1.0
    %v1078 = vrcp.pop %v1077
    %v1079 = vmul.f32 1.0, %v1078
    %v1080 = vtanh.pop %v1073
    %v1081 = vmul.f32 %v1079, %v986
    %1083 = vrot.lane.b32.xlu0 %v1080, 64
    %v1084 = vpop.permute.xlu0 %1083
    %v1086 = vmul.f32 %v1079, %v1084
    %1088 = vrot.lane.b32.xlu0 %v1086, 32
    %v1089 = vpop.permute.xlu0 %1088
    %v1091 = vadd.f32 %v1081, %v1089
    %v1092 = vtanh.pop %v1091
    %1094 = vrot.lane.b32.xlu0 %v1092, 64
    %v1095 = vpop.permute.xlu0 %1094
    %v1097 = vmul.f32 %v1079, %v1095
    %1099 = vrot.lane.b32.xlu0 %v1097, 32
    %v1100 = vpop.permute.xlu0 %1099
    %s1102 = scalar_lea.vmem [#allocation3], 14
    %1103 = vst.msk [vmem:[%s1102] sm:$0x3] %vm367, %v1100
    %v1104 = vld [vmem:[#allocation3] sm:$0x3]
    %v1105 = vld [vmem:[#allocation3 + $0x2] sm:$0x3]
    %v1106 = vld [vmem:[#allocation3 + $0x4] sm:$0x3]
    %v1107 = vld [vmem:[#allocation3 + $0x6] sm:$0x3]
    %v1108 = vld [vmem:[#allocation3 + $0x8] sm:$0x3]
    %v1109 = vld [vmem:[#allocation3 + $0xa] sm:$0x3]
    %v1110 = vld [vmem:[#allocation3 + $0xc] sm:$0x3]
    %v1111 = vld [vmem:[#allocation3 + $0xe] sm:$0x3]
    %v1112 = vld [vmem:[%s4] sm:$0x1]
    %v1114 = vlaneseq
    %v1115 = vshrl.u32 %v1114, 7
    %v1116 = vsub.s32 0, %v1115
    %v1117 = vrot.slane %v1112, %v1116
    %v1119 = vmul.f32 %v1104, %v1117
    %v1120 = vmul.f32 %v1105, %v1117
    %v1121 = vmul.f32 %v1106, %v1117
    %v1122 = vmul.f32 %v1107, %v1117
    %v1123 = vmul.f32 %v1108, %v1117
    %v1124 = vmul.f32 %v1109, %v1117
    %v1125 = vmul.f32 %v1110, %v1117
    %v1126 = vmul.f32 %v1111, %v1117
    %v1127 = vsel %vm367, %v1119, 0.0
    %1128 = vadd.xlane.f32.xlu0 %v1127
    %v1129 = vpop.xlane.xlu0 %1128
    %v1130 = vsel %vm367, %v1120, 0.0
    %1131 = vadd.xlane.f32.xlu0 %v1130
    %v1132 = vpop.xlane.xlu0 %1131
    %v1133 = vsel %vm367, %v1121, 0.0
    %1134 = vadd.xlane.f32.xlu0 %v1133
    %v1135 = vpop.xlane.xlu0 %1134
    %v1136 = vsel %vm367, %v1122, 0.0
    %1137 = vadd.xlane.f32.xlu0 %v1136
    %v1138 = vpop.xlane.xlu0 %1137
    %v1139 = vsel %vm367, %v1123, 0.0
    %1140 = vadd.xlane.f32.xlu0 %v1139
    %v1141 = vpop.xlane.xlu0 %1140
    %v1142 = vsel %vm367, %v1124, 0.0
    %1143 = vadd.xlane.f32.xlu0 %v1142
    %v1144 = vpop.xlane.xlu0 %1143
    %v1145 = vsel %vm367, %v1125, 0.0
    %1146 = vadd.xlane.f32.xlu0 %v1145
    %v1147 = vpop.xlane.xlu0 %1146
    %v1148 = vsel %vm367, %v1126, 0.0
    %1149 = vadd.xlane.f32.xlu0 %v1148
    %v1150 = vpop.xlane.xlu0 %1149
    %v1151 = vld [vmem:[#allocation4] sm:$0x1]
    %v1153 = vlaneseq
    %v1154 = vshrl.u32 %v1153, 7
    %v1155 = vsub.s32 0, %v1154
    %v1156 = vrot.slane %v1151, %v1155
    %1157 = vset.pattern.permute.xlu0 0
    %1158 = vperm.xlu0 %1157, %v1156
    %v1159 = vpop.permute.xlu0 %1158
    %v1161 = vadd.f32 %v1129, %v1159
    %v1162 = vadd.f32 %v1132, %v1159
    %v1163 = vadd.f32 %v1135, %v1159
    %v1164 = vadd.f32 %v1138, %v1159
    %v1165 = vadd.f32 %v1141, %v1159
    %v1166 = vadd.f32 %v1144, %v1159
    %v1167 = vadd.f32 %v1147, %v1159
    %v1168 = vadd.f32 %v1150, %v1159
    %v1177 = vlaneseq
    %v1178 = vand.u32 %v1177, 127
    %v1179 = vlaneseq
    %v1180 = vshrl.u32 %v1179, 7
    %v1181 = vsub.s32 %v1178, %v1180
    %v1182 = vrot.slane %v1161, %v1181
    %v1183 = vlaneseq
    %v1184 = vshrl.u32 %v1183, 7
    %v1185 = vsub.s32 %v1178, %v1184
    %v1186 = vrot.slane %v1162, %v1185
    %v1187 = vlaneseq
    %v1188 = vshrl.u32 %v1187, 7
    %v1189 = vsub.s32 %v1178, %v1188
    %v1190 = vrot.slane %v1163, %v1189
    %v1191 = vlaneseq
    %v1192 = vshrl.u32 %v1191, 7
    %v1193 = vsub.s32 %v1178, %v1192
    %v1194 = vrot.slane %v1164, %v1193
    %v1195 = vlaneseq
    %v1196 = vshrl.u32 %v1195, 7
    %v1197 = vsub.s32 %v1178, %v1196
    %v1198 = vrot.slane %v1165, %v1197
    %v1199 = vlaneseq
    %v1200 = vshrl.u32 %v1199, 7
    %v1201 = vsub.s32 %v1178, %v1200
    %v1202 = vrot.slane %v1166, %v1201
    %v1203 = vlaneseq
    %v1204 = vshrl.u32 %v1203, 7
    %v1205 = vsub.s32 %v1178, %v1204
    %v1206 = vrot.slane %v1167, %v1205
    %v1207 = vlaneseq
    %v1208 = vshrl.u32 %v1207, 7
    %v1209 = vsub.s32 %v1178, %v1208
    %v1210 = vrot.slane %v1168, %v1209
    %vm1211 = vcmask 1041409
    %v1212 = vsel %vm1211, %v1186, %v1182
    %vm1213 = vcmask 1042434
    %v1214 = vsel %vm1213, %v1190, %v1212
    %vm1215 = vcmask 1043459
    %v1216 = vsel %vm1215, %v1194, %v1214
    %vm1217 = vcmask 1044484
    %v1218 = vsel %vm1217, %v1198, %v1216
    %vm1219 = vcmask 1045509
    %v1220 = vsel %vm1219, %v1202, %v1218
    %vm1221 = vcmask 1046534
    %v1222 = vsel %vm1221, %v1206, %v1220
    %vm1223 = vcmask 1047559
    %v1224 = vsel %vm1223, %v1210, %v1222
    %1226 = vxpose.xlu0.b32.start [1/16] %v1224, 128
    %1227 = vxpose.xlu0.b32.cont [2/16] 0.0, 128
    %1228 = vxpose.xlu0.b32.cont [3/16] 0.0, 128
    %1229 = vxpose.xlu0.b32.cont [4/16] 0.0, 128
    %1230 = vxpose.xlu0.b32.cont [5/16] 0.0, 128
    %1231 = vxpose.xlu0.b32.cont [6/16] 0.0, 128
    %1232 = vxpose.xlu0.b32.cont [7/16] 0.0, 128
    %1233 = vxpose.xlu0.b32.cont [8/16] 0.0, 128
    %1234 = vxpose.xlu0.b32.cont [9/16] 0.0, 128
    %1235 = vxpose.xlu0.b32.cont [10/16] 0.0, 128
    %1236 = vxpose.xlu0.b32.cont [11/16] 0.0, 128
    %1237 = vxpose.xlu0.b32.cont [12/16] 0.0, 128
    %1238 = vxpose.xlu0.b32.cont [13/16] 0.0, 128
    %1239 = vxpose.xlu0.b32.cont [14/16] 0.0, 128
    %1240 = vxpose.xlu0.b32.cont [15/16] 0.0, 128
    %1241 = vxpose.xlu0.b32.end [16/16] 0.0, 128
    %v1242 = vpop.trf.xlu0
    %v1243 = vpop.trf.xlu0
    %v1244 = vpop.trf.xlu0
    %v1245 = vpop.trf.xlu0
    %v1246 = vpop.trf.xlu0
    %v1247 = vpop.trf.xlu0
    %v1248 = vpop.trf.xlu0
    %v1249 = vpop.trf.xlu0
    %v1250 = vpop.trf.xlu0
    %v1251 = vpop.trf.xlu0
    %v1252 = vpop.trf.xlu0
    %v1253 = vpop.trf.xlu0
    %v1254 = vpop.trf.xlu0
    %v1255 = vpop.trf.xlu0
    %v1256 = vpop.trf.xlu0
    %v1257 = vpop.trf.xlu0
    %vm1258 = vcmask 58368
    %1259 = vst.msk [vmem:[#allocation11] sm:$0x3] %vm1258, %v1242
    // Predicated region
    $region38: #{tpu_custom_call.1} parent=1 // pred_check
      _
    $region39: #{tpu_custom_call.1} parent=1 // pred_check_branch
      %1261 = sbr.rel (0) target = $region41
    $region40: #{tpu_custom_call.1} parent=1 // pred_region
      %s1263 = ssub.s32 32, 32
      %1264 = vsyncadd [#allocation7], %s1263
      %s1266 = sshll.u32 [#allocation11], 4
      %s1267 = int_to_ptr.vmem [resolvable:$true] %s1266
      %1269 = dma.vmem_to_hbm [thread:$0]  %s1267, 32, %s6, [#allocation7]
    $region41: #{tpu_custom_call.1} parent=1 // pred_fallthru
      _
    // Predicated region
    $region42: #{tpu_custom_call.1} parent=1 // pred_check
      _
    $region43: #{tpu_custom_call.1} parent=1 // pred_check_branch
      %1271 = sbr.rel (0) target = $region45
    $region44: #{tpu_custom_call.1} parent=1 // pred_region
      %1272 = dma.done [#allocation7], 32
    $region45: #{tpu_custom_call.1} parent=1 // pred_fallthru
      _
    %1273 = vsyncpa [#allocation6], 1
    %1274 = vsyncpa [#allocation9], 1
    %1275 = vsyncpa [#allocation7], 1

</llo_original>
